<compile_context>
chip_gen: v6e
topology: v6e:2x2x1
jax: 0.10.0
libtpu: 0.0.40
codegen_flags: <defaults>
</compile_context>

<pallas_src>
import functools

import jax
import jax.numpy as jnp
from jax.experimental import pallas as pl
from jax.experimental.pallas import tpu as pltpu

D_MODEL = 256   # d_model used by dcp.Transformer (emb_dims)
D_FF = 1024     # d_ff used by dcp.Transformer (ff_dims)


def _round_up(x, m):
    return ((x + m - 1) // m) * m


# ----------------------------------------------------------------------------
# fused FFN kernel:  out = relu(x @ w1 + b1) @ w2 + b2
# x_ref / w1_ref / w2_ref arrive as bf16; accumulation is f32 on the MXU.
# ----------------------------------------------------------------------------
def _ffn_kernel(x_ref, w1_ref, b1_ref, w2_ref, b2_ref, o_ref):
    h = jnp.dot(x_ref[...], w1_ref[...],
                preferred_element_type=jnp.float32)          # (TM, d_ff) f32
    h = jnp.maximum(h + b1_ref[...], 0.0).astype(jnp.bfloat16)   # ReLU, bf16
    y = jnp.dot(h, w2_ref[...],
                preferred_element_type=jnp.float32) + b2_ref[...]
    # norm is an empty nn.Sequential (identity); the transpose(2,1) pair
    # around it cancels, so nothing else to do here.
    o_ref[...] = y.astype(o_ref.dtype)


# ----------------------------------------------------------------------------
# wrapper
# ----------------------------------------------------------------------------
def positionwise_feed_forward(x, params, *, block_m=512):
    """x: (..., d_model) -> (..., d_model). Leading dims are flattened into M."""
    w1, b1, w2, b2 = params["w1"], params["b1"], params["w2"], params["b2"]
    d_model, d_ff = w1.shape
    assert x.shape[-1] == d_model

    lead_shape = x.shape[:-1]
    m = 1
    for s in lead_shape:
        m *= s

    out_dtype = x.dtype

    # bf16 operands for the MXU (accumulation stays f32 inside the kernel).
    x2 = x.reshape(m, d_model).astype(jnp.bfloat16)
    w1b = w1.astype(jnp.bfloat16)
    w2b = w2.astype(jnp.bfloat16)
    b1f = b1.astype(jnp.float32)
    b2f = b2.astype(jnp.float32)

    # Row-tile size: multiple of 16 (bf16 sublane packing), capped at block_m
    # (block_m is a multiple of 256 so large tiles fill the v6e/v7x MXU).
    tm = min(block_m, _round_up(m, 16))
    grid = (pl.cdiv(m, tm),)   # partial last tile is masked by Pallas

    flops = 4 * m * d_model * d_ff                       # two matmuls
    bytes_accessed = (
        x2.size * 2                                      # bf16 activations in
        + m * d_model * jnp.dtype(out_dtype).itemsize    # output
        + (w1b.size + w2b.size) * 2                      # bf16 weights
        + (b1f.size + b2f.size) * 4                      # f32 biases
    )

    out = pl.pallas_call(
        _ffn_kernel,
        out_shape=jax.ShapeDtypeStruct((m, d_model), out_dtype),
        grid=grid,
        in_specs=[
            pl.BlockSpec((tm, d_model), lambda i: (i, 0)),        # activations
            pl.BlockSpec((d_model, d_ff), lambda i: (0, 0)),      # w1 (resident)
            pl.BlockSpec((1, d_ff), lambda i: (0, 0)),            # b1
            pl.BlockSpec((d_ff, d_model), lambda i: (0, 0)),      # w2 (resident)
            pl.BlockSpec((1, d_model), lambda i: (0, 0)),         # b2
        ],
        out_specs=pl.BlockSpec((tm, d_model), lambda i: (i, 0)),
        compiler_params=pltpu.CompilerParams(
            dimension_semantics=("parallel",),
            vmem_limit_bytes=48 * 1024 * 1024,
        ),
        cost_estimate=pl.CostEstimate(
            flops=flops, transcendentals=0, bytes_accessed=bytes_accessed),
    )(x2, w1b, b1f, w2b, b2f)

    return out.reshape(lead_shape + (d_model,))


# ----------------------------------------------------------------------------
# deterministic parameter init (synthetic; no checkpoint load)
# ----------------------------------------------------------------------------
def init_params(key, d_model=D_MODEL, d_ff=D_FF):
    k1, k2 = jax.random.split(key)
    s = 0.03
    return {
        "w1": jax.random.normal(k1, (d_model, d_ff), jnp.float32) * s,
        "b1": jnp.full((1, d_ff), 0.01, jnp.float32),
        "w2": jax.random.normal(k2, (d_ff, d_model), jnp.float32) * s,
        "b2": jnp.full((1, d_model), -0.01, jnp.float32),
    }


# ----------------------------------------------------------------------------
# pure-JAX reference mirroring the PyTorch forward
# (norm = identity Sequential; the transpose(2,1) pair cancels; dropout=None)
# ----------------------------------------------------------------------------
def ref_positionwise_feed_forward(x, params):
    h = jnp.maximum(x @ params["w1"] + params["b1"], 0.0)
    return h @ params["w2"] + params["b2"]


# ----------------------------------------------------------------------------
if __name__ == "__main__":
    key = jax.random.PRNGKey(0)
    kx, kp = jax.random.split(key)

    B, S = 2, 16                       # small shapes; dcp uses d_model=256, d_ff=1024
    x = jax.random.normal(kx, (B, S, D_MODEL), jnp.float32)
    params = init_params(kp)

    fwd = jax.jit(functools.partial(positionwise_feed_forward, block_m=512))
    out = fwd(x, params)
    jax.block_until_ready(out)

    assert out.shape == (B, S, D_MODEL)
    ref = ref_positionwise_feed_forward(x, params)
    max_err = float(jnp.max(jnp.abs(out - ref)))
    # bf16 MXU operands with f32 accumulation -> a few-e-3 absolute error at
    # these scales; 5e-2 tolerance is comfortably loose.
    assert jnp.allclose(out, ref, atol=5e-2, rtol=5e-2), max_err
    print("KERNEL_OK")
</pallas_src>

<mosaic_0001>
module attributes {stable_mosaic.version = 11 : i64} {
  func.func @_ffn_kernel(%arg0: i32, %arg1: memref<32x256xbf16, #tpu.memory_space<vmem>>, %arg2: memref<256x1024xbf16, #tpu.memory_space<vmem>>, %arg3: memref<1x1024xf32, #tpu.memory_space<vmem>>, %arg4: memref<1024x256xbf16, #tpu.memory_space<vmem>>, %arg5: memref<1x256xf32, #tpu.memory_space<vmem>>, %arg6: memref<32x256xf32, #tpu.memory_space<vmem>>) attributes {dimension_semantics = [#tpu.dimension_semantics<parallel>], iteration_bounds = array<i64: 1>, scalar_prefetch = 0 : i64, scratch_operands = 0 : i64, tpu.core_type = #tpu.core_type<tc>, window_params = [{transform_indices = @transform_0, window_bounds = array<i64: 32, 256>}, {pipeline_mode = #tpu.pipeline_mode<synchronous>, transform_indices = @transform_1, window_bounds = array<i64: 256, 1024>}, {pipeline_mode = #tpu.pipeline_mode<synchronous>, transform_indices = @transform_2, window_bounds = array<i64: 1, 1024>}, {pipeline_mode = #tpu.pipeline_mode<synchronous>, transform_indices = @transform_3, window_bounds = array<i64: 1024, 256>}, {pipeline_mode = #tpu.pipeline_mode<synchronous>, transform_indices = @transform_4, window_bounds = array<i64: 1, 256>}, {transform_indices = @transform_5, window_bounds = array<i64: 32, 256>}]} {
    %c0 = arith.constant 0 : index
    %c0_0 = arith.constant 0 : index
    %0 = vector.load %arg1[%c0, %c0_0] : memref<32x256xbf16, #tpu.memory_space<vmem>>, vector<32x256xbf16>
    %c0_1 = arith.constant 0 : index
    %c0_2 = arith.constant 0 : index
    %1 = vector.load %arg2[%c0_1, %c0_2] : memref<256x1024xbf16, #tpu.memory_space<vmem>>, vector<256x1024xbf16>
    %cst = arith.constant dense<0.000000e+00> : vector<32x1024xf32>
    %2 = tpu.matmul %0, %1, %cst {dimension_numbers = #tpu.dot_dimension_numbers<[1], [0], [0], [1], [0, 0, 1, 1], [], []>} : vector<32x256xbf16>, vector<256x1024xbf16>, vector<32x1024xf32> -> vector<32x1024xf32>
    %c0_3 = arith.constant 0 : index
    %c0_4 = arith.constant 0 : index
    %3 = vector.load %arg3[%c0_3, %c0_4] : memref<1x1024xf32, #tpu.memory_space<vmem>>, vector<1x1024xf32>
    %4 = vector.broadcast %3 : vector<1x1024xf32> to vector<32x1024xf32>
    %5 = arith.addf %2, %4 : vector<32x1024xf32>
    %cst_5 = arith.constant 0.000000e+00 : f32
    %6 = vector.broadcast %cst_5 : f32 to vector<32x1024xf32>
    %7 = arith.maximumf %5, %6 : vector<32x1024xf32>
    %8 = arith.truncf %7 : vector<32x1024xf32> to vector<32x1024xbf16>
    %c0_6 = arith.constant 0 : index
    %c0_7 = arith.constant 0 : index
    %9 = vector.load %arg4[%c0_6, %c0_7] : memref<1024x256xbf16, #tpu.memory_space<vmem>>, vector<1024x256xbf16>
    %cst_8 = arith.constant dense<0.000000e+00> : vector<32x256xf32>
    %10 = tpu.matmul %8, %9, %cst_8 {dimension_numbers = #tpu.dot_dimension_numbers<[1], [0], [0], [1], [0, 0, 1, 1], [], []>} : vector<32x1024xbf16>, vector<1024x256xbf16>, vector<32x256xf32> -> vector<32x256xf32>
    %c0_9 = arith.constant 0 : index
    %c0_10 = arith.constant 0 : index
    %11 = vector.load %arg5[%c0_9, %c0_10] : memref<1x256xf32, #tpu.memory_space<vmem>>, vector<1x256xf32>
    %12 = vector.broadcast %11 : vector<1x256xf32> to vector<32x256xf32>
    %13 = arith.addf %10, %12 : vector<32x256xf32>
    %c0_11 = arith.constant 0 : index
    %c0_12 = arith.constant 0 : index
    %14 = vector.load %arg6[%c0_11, %c0_12] : memref<32x256xf32, #tpu.memory_space<vmem>>, vector<32x256xf32>
    tpu.vector_store %arg6[%c0_11, %c0_12], %13 {strides = array<i32>} : memref<32x256xf32, #tpu.memory_space<vmem>>, vector<32x256xf32>,
    return
  }
  func.func @transform_0(%arg0: i32) -> (i32, i32) {
    %c0_i32 = arith.constant 0 : i32
    %c0_i32_0 = arith.constant 0 : i32
    return %arg0, %c0_i32 : i32, i32
  }
  func.func @transform_1(%arg0: i32) -> (i32, i32) {
    %c0_i32 = arith.constant 0 : i32
    %c0_i32_0 = arith.constant 0 : i32
    %c0_i32_1 = arith.constant 0 : i32
    return %c0_i32, %c0_i32_0 : i32, i32
  }
  func.func @transform_2(%arg0: i32) -> (i32, i32) {
    %c0_i32 = arith.constant 0 : i32
    %c0_i32_0 = arith.constant 0 : i32
    %c0_i32_1 = arith.constant 0 : i32
    return %c0_i32, %c0_i32_0 : i32, i32
  }
  func.func @transform_3(%arg0: i32) -> (i32, i32) {
    %c0_i32 = arith.constant 0 : i32
    %c0_i32_0 = arith.constant 0 : i32
    %c0_i32_1 = arith.constant 0 : i32
    return %c0_i32, %c0_i32_0 : i32, i32
  }
  func.func @transform_4(%arg0: i32) -> (i32, i32) {
    %c0_i32 = arith.constant 0 : i32
    %c0_i32_0 = arith.constant 0 : i32
    %c0_i32_1 = arith.constant 0 : i32
    return %c0_i32, %c0_i32_0 : i32, i32
  }
  func.func @transform_5(%arg0: i32) -> (i32, i32) {
    %c0_i32 = arith.constant 0 : i32
    %c0_i32_0 = arith.constant 0 : i32
    return %arg0, %c0_i32 : i32, i32
  }
}

</mosaic_0001>

<llo_original>
// kernel: positionwise_feed_forward.1
$region0: #{positionwise_feed_forward.1}
  #allocation0 [shape = 'u32[]', space=smem, size = 0x4, offset = 0x4, fixed_abs, tag = 'smem constant byte address 0x4 - core index']
  #allocation1 [shape = 'u32[144,128]{1,0:T(1,128)}', space=vmem, size = 0x12000, scoped, tag = 'internal scratch']
  %s0 = inlined_call_operand.vmem [shape: bf16[32,256], index: 0, kind: input, shape index: {}]
  %s1 = inlined_call_operand.vmem [shape: bf16[256,1024], index: 1, kind: input, shape index: {}]
  %s2 = inlined_call_operand.vmem [shape: f32[1,1024], index: 2, kind: input, shape index: {}]
  %s3 = inlined_call_operand.vmem [shape: bf16[1024,256], index: 3, kind: input, shape index: {}]
  %s4 = inlined_call_operand.vmem [shape: f32[1,256], index: 4, kind: input, shape index: {}]
  %s5 = inlined_call_operand.hbm [shape: f32[32,256], index: 5, kind: output, shape index: {}]
  %s6 = sld [smem:[#allocation0]]
  $region30: #{positionwise_feed_forward.1} parent=0
    _
  %s8 = ssub.s32 1, %s6
  %s9 = scalar_select 0, %s8, %s6
  $region1: #{positionwise_feed_forward.1} parent=0
    #allocation2 [shape = 'u8[32768]{0}', space=vmem, size = 0x8000, scoped, tag = 'output window, operand 0, single buffered']
    #allocation3 [shape = 's32[1]{0}', space=sflag, size = 0x4, scoped, tag = 'scoped memory for positionwise_feed_forward.1']
    %10 = vsyncpa [#allocation3], 0
    // Predicated region
    $region2: #{positionwise_feed_forward.1} parent=1 // pred_check
      _
    $region3: #{positionwise_feed_forward.1} parent=1 // pred_check_branch
      %12 = sbr.rel (0) target = $region5
    $region4: #{positionwise_feed_forward.1} parent=1 // pred_region
      _
    $region5: #{positionwise_feed_forward.1} parent=1 // pred_fallthru
      _
    // Predicated region
    $region6: #{positionwise_feed_forward.1} parent=1 // pred_check
      _
    $region7: #{positionwise_feed_forward.1} parent=1 // pred_check_branch
      %14 = sbr.rel (0) target = $region9
    $region8: #{positionwise_feed_forward.1} parent=1 // pred_region
      _
    $region9: #{positionwise_feed_forward.1} parent=1 // pred_fallthru
      _
    // Predicated region
    $region10: #{positionwise_feed_forward.1} parent=1 // pred_check
      _
    $region11: #{positionwise_feed_forward.1} parent=1 // pred_check_branch
      %16 = sbr.rel (0) target = $region13
    $region12: #{positionwise_feed_forward.1} parent=1 // pred_region
      _
    $region13: #{positionwise_feed_forward.1} parent=1 // pred_fallthru
      _
    // Predicated region
    $region14: #{positionwise_feed_forward.1} parent=1 // pred_check
      _
    $region15: #{positionwise_feed_forward.1} parent=1 // pred_check_branch
      %18 = sbr.rel (0) target = $region17
    $region16: #{positionwise_feed_forward.1} parent=1 // pred_region
      _
    $region17: #{positionwise_feed_forward.1} parent=1 // pred_fallthru
      _
    // Predicated region
    $region18: #{positionwise_feed_forward.1} parent=1 // pred_check
      _
    $region19: #{positionwise_feed_forward.1} parent=1 // pred_check_branch
      %20 = sbr.rel (0) target = $region21
    $region20: #{positionwise_feed_forward.1} parent=1 // pred_region
      _
    $region21: #{positionwise_feed_forward.1} parent=1 // pred_fallthru
      _
    %v21 = vld [vmem:[%s0] sm:$0xff]
    %v22 = vld [vmem:[%s0 + $0x8] sm:$0xff]
    %v23 = vld [vmem:[%s0 + $0x10] sm:$0xff]
    %v24 = vld [vmem:[%s0 + $0x18] sm:$0xff]
    %v25 = vld [vmem:[%s1] sm:$0xff]
    %v26 = vld [vmem:[%s1 + $0x8] sm:$0xff]
    %v27 = vld [vmem:[%s1 + $0x10] sm:$0xff]
    %v28 = vld [vmem:[%s1 + $0x18] sm:$0xff]
    %v29 = vld [vmem:[%s1 + $0x20] sm:$0xff]
    %v30 = vld [vmem:[%s1 + $0x28] sm:$0xff]
    %v31 = vld [vmem:[%s1 + $0x30] sm:$0xff]
    %v32 = vld [vmem:[%s1 + $0x38] sm:$0xff]
    %v33 = vld [vmem:[%s1 + $0x40] sm:$0xff]
    %v34 = vld [vmem:[%s1 + $0x48] sm:$0xff]
    %v35 = vld [vmem:[%s1 + $0x50] sm:$0xff]
    %v36 = vld [vmem:[%s1 + $0x58] sm:$0xff]
    %v37 = vld [vmem:[%s1 + $0x60] sm:$0xff]
    %v38 = vld [vmem:[%s1 + $0x68] sm:$0xff]
    %v39 = vld [vmem:[%s1 + $0x70] sm:$0xff]
    %v40 = vld [vmem:[%s1 + $0x78] sm:$0xff]
    %v41 = vld [vmem:[%s1 + $0x80] sm:$0xff]
    %v42 = vld [vmem:[%s1 + $0x88] sm:$0xff]
    %v43 = vld [vmem:[%s1 + $0x90] sm:$0xff]
    %v44 = vld [vmem:[%s1 + $0x98] sm:$0xff]
    %v45 = vld [vmem:[%s1 + $0xa0] sm:$0xff]
    %v46 = vld [vmem:[%s1 + $0xa8] sm:$0xff]
    %v47 = vld [vmem:[%s1 + $0xb0] sm:$0xff]
    %v48 = vld [vmem:[%s1 + $0xb8] sm:$0xff]
    %v49 = vld [vmem:[%s1 + $0xc0] sm:$0xff]
    %v50 = vld [vmem:[%s1 + $0xc8] sm:$0xff]
    %v51 = vld [vmem:[%s1 + $0xd0] sm:$0xff]
    %v52 = vld [vmem:[%s1 + $0xd8] sm:$0xff]
    %v53 = vld [vmem:[%s1 + $0xe0] sm:$0xff]
    %v54 = vld [vmem:[%s1 + $0xe8] sm:$0xff]
    %v55 = vld [vmem:[%s1 + $0xf0] sm:$0xff]
    %v56 = vld [vmem:[%s1 + $0xf8] sm:$0xff]
    %v57 = vld [vmem:[%s1 + $0x100] sm:$0xff]
    %v58 = vld [vmem:[%s1 + $0x108] sm:$0xff]
    %v59 = vld [vmem:[%s1 + $0x110] sm:$0xff]
    %v60 = vld [vmem:[%s1 + $0x118] sm:$0xff]
    %v61 = vld [vmem:[%s1 + $0x120] sm:$0xff]
    %v62 = vld [vmem:[%s1 + $0x128] sm:$0xff]
    %v63 = vld [vmem:[%s1 + $0x130] sm:$0xff]
    %v64 = vld [vmem:[%s1 + $0x138] sm:$0xff]
    %v65 = vld [vmem:[%s1 + $0x140] sm:$0xff]
    %v66 = vld [vmem:[%s1 + $0x148] sm:$0xff]
    %v67 = vld [vmem:[%s1 + $0x150] sm:$0xff]
    %v68 = vld [vmem:[%s1 + $0x158] sm:$0xff]
    %v69 = vld [vmem:[%s1 + $0x160] sm:$0xff]
    %v70 = vld [vmem:[%s1 + $0x168] sm:$0xff]
    %v71 = vld [vmem:[%s1 + $0x170] sm:$0xff]
    %v72 = vld [vmem:[%s1 + $0x178] sm:$0xff]
    %v73 = vld [vmem:[%s1 + $0x180] sm:$0xff]
    %v74 = vld [vmem:[%s1 + $0x188] sm:$0xff]
    %v75 = vld [vmem:[%s1 + $0x190] sm:$0xff]
    %v76 = vld [vmem:[%s1 + $0x198] sm:$0xff]
    %v77 = vld [vmem:[%s1 + $0x1a0] sm:$0xff]
    %v78 = vld [vmem:[%s1 + $0x1a8] sm:$0xff]
    %v79 = vld [vmem:[%s1 + $0x1b0] sm:$0xff]
    %v80 = vld [vmem:[%s1 + $0x1b8] sm:$0xff]
    %v81 = vld [vmem:[%s1 + $0x1c0] sm:$0xff]
    %v82 = vld [vmem:[%s1 + $0x1c8] sm:$0xff]
    %v83 = vld [vmem:[%s1 + $0x1d0] sm:$0xff]
    %v84 = vld [vmem:[%s1 + $0x1d8] sm:$0xff]
    %v85 = vld [vmem:[%s1 + $0x1e0] sm:$0xff]
    %v86 = vld [vmem:[%s1 + $0x1e8] sm:$0xff]
    %v87 = vld [vmem:[%s1 + $0x1f0] sm:$0xff]
    %v88 = vld [vmem:[%s1 + $0x1f8] sm:$0xff]
    %v89 = vld [vmem:[%s1 + $0x200] sm:$0xff]
    %v90 = vld [vmem:[%s1 + $0x208] sm:$0xff]
    %v91 = vld [vmem:[%s1 + $0x210] sm:$0xff]
    %v92 = vld [vmem:[%s1 + $0x218] sm:$0xff]
    %v93 = vld [vmem:[%s1 + $0x220] sm:$0xff]
    %v94 = vld [vmem:[%s1 + $0x228] sm:$0xff]
    %v95 = vld [vmem:[%s1 + $0x230] sm:$0xff]
    %v96 = vld [vmem:[%s1 + $0x238] sm:$0xff]
    %v97 = vld [vmem:[%s1 + $0x240] sm:$0xff]
    %v98 = vld [vmem:[%s1 + $0x248] sm:$0xff]
    %v99 = vld [vmem:[%s1 + $0x250] sm:$0xff]
    %v100 = vld [vmem:[%s1 + $0x258] sm:$0xff]
    %v101 = vld [vmem:[%s1 + $0x260] sm:$0xff]
    %v102 = vld [vmem:[%s1 + $0x268] sm:$0xff]
    %v103 = vld [vmem:[%s1 + $0x270] sm:$0xff]
    %v104 = vld [vmem:[%s1 + $0x278] sm:$0xff]
    %v105 = vld [vmem:[%s1 + $0x280] sm:$0xff]
    %v106 = vld [vmem:[%s1 + $0x288] sm:$0xff]
    %v107 = vld [vmem:[%s1 + $0x290] sm:$0xff]
    %v108 = vld [vmem:[%s1 + $0x298] sm:$0xff]
    %v109 = vld [vmem:[%s1 + $0x2a0] sm:$0xff]
    %v110 = vld [vmem:[%s1 + $0x2a8] sm:$0xff]
    %v111 = vld [vmem:[%s1 + $0x2b0] sm:$0xff]
    %v112 = vld [vmem:[%s1 + $0x2b8] sm:$0xff]
    %v113 = vld [vmem:[%s1 + $0x2c0] sm:$0xff]
    %v114 = vld [vmem:[%s1 + $0x2c8] sm:$0xff]
    %v115 = vld [vmem:[%s1 + $0x2d0] sm:$0xff]
    %v116 = vld [vmem:[%s1 + $0x2d8] sm:$0xff]
    %v117 = vld [vmem:[%s1 + $0x2e0] sm:$0xff]
    %v118 = vld [vmem:[%s1 + $0x2e8] sm:$0xff]
    %v119 = vld [vmem:[%s1 + $0x2f0] sm:$0xff]
    %v120 = vld [vmem:[%s1 + $0x2f8] sm:$0xff]
    %v121 = vld [vmem:[%s1 + $0x300] sm:$0xff]
    %v122 = vld [vmem:[%s1 + $0x308] sm:$0xff]
    %v123 = vld [vmem:[%s1 + $0x310] sm:$0xff]
    %v124 = vld [vmem:[%s1 + $0x318] sm:$0xff]
    %v125 = vld [vmem:[%s1 + $0x320] sm:$0xff]
    %v126 = vld [vmem:[%s1 + $0x328] sm:$0xff]
    %v127 = vld [vmem:[%s1 + $0x330] sm:$0xff]
    %v128 = vld [vmem:[%s1 + $0x338] sm:$0xff]
    %v129 = vld [vmem:[%s1 + $0x340] sm:$0xff]
    %v130 = vld [vmem:[%s1 + $0x348] sm:$0xff]
    %v131 = vld [vmem:[%s1 + $0x350] sm:$0xff]
    %v132 = vld [vmem:[%s1 + $0x358] sm:$0xff]
    %v133 = vld [vmem:[%s1 + $0x360] sm:$0xff]
    %v134 = vld [vmem:[%s1 + $0x368] sm:$0xff]
    %v135 = vld [vmem:[%s1 + $0x370] sm:$0xff]
    %v136 = vld [vmem:[%s1 + $0x378] sm:$0xff]
    %v137 = vld [vmem:[%s1 + $0x380] sm:$0xff]
    %v138 = vld [vmem:[%s1 + $0x388] sm:$0xff]
    %v139 = vld [vmem:[%s1 + $0x390] sm:$0xff]
    %v140 = vld [vmem:[%s1 + $0x398] sm:$0xff]
    %v141 = vld [vmem:[%s1 + $0x3a0] sm:$0xff]
    %v142 = vld [vmem:[%s1 + $0x3a8] sm:$0xff]
    %v143 = vld [vmem:[%s1 + $0x3b0] sm:$0xff]
    %v144 = vld [vmem:[%s1 + $0x3b8] sm:$0xff]
    %v145 = vld [vmem:[%s1 + $0x3c0] sm:$0xff]
    %v146 = vld [vmem:[%s1 + $0x3c8] sm:$0xff]
    %v147 = vld [vmem:[%s1 + $0x3d0] sm:$0xff]
    %v148 = vld [vmem:[%s1 + $0x3d8] sm:$0xff]
    %v149 = vld [vmem:[%s1 + $0x3e0] sm:$0xff]
    %v150 = vld [vmem:[%s1 + $0x3e8] sm:$0xff]
    %v151 = vld [vmem:[%s1 + $0x3f0] sm:$0xff]
    %v152 = vld [vmem:[%s1 + $0x3f8] sm:$0xff]
    %v153 = vld [vmem:[%s2] sm:$0xff]
    %v155 = vlaneseq
    %v156 = vshrl.u32 %v155, 7
    %v157 = vsub.s32 0, %v156
    %v158 = vrot.slane %v153, %v157
    %v159 = vlaneseq
    %v160 = vshrl.u32 %v159, 7
    %v161 = vsub.s32 1, %v160
    %v162 = vrot.slane %v153, %v161
    %v163 = vlaneseq
    %v164 = vshrl.u32 %v163, 7
    %v165 = vsub.s32 2, %v164
    %v166 = vrot.slane %v153, %v165
    %v167 = vlaneseq
    %v168 = vshrl.u32 %v167, 7
    %v169 = vsub.s32 3, %v168
    %v170 = vrot.slane %v153, %v169
    %v171 = vlaneseq
    %v172 = vshrl.u32 %v171, 7
    %v173 = vsub.s32 4, %v172
    %v174 = vrot.slane %v153, %v173
    %v175 = vlaneseq
    %v176 = vshrl.u32 %v175, 7
    %v177 = vsub.s32 5, %v176
    %v178 = vrot.slane %v153, %v177
    %v179 = vlaneseq
    %v180 = vshrl.u32 %v179, 7
    %v181 = vsub.s32 6, %v180
    %v182 = vrot.slane %v153, %v181
    %v183 = vlaneseq
    %v184 = vshrl.u32 %v183, 7
    %v185 = vsub.s32 7, %v184
    %v186 = vrot.slane %v153, %v185
    %v199 = vunpack.c.l.b16 %v21
    %v200 = vunpack.c.h.b16 %v21
    %v201 = vunpack.c.l.b16 %v22
    %v202 = vunpack.c.h.b16 %v22
    %v203 = vunpack.c.l.b16 %v23
    %v204 = vunpack.c.h.b16 %v23
    %v205 = vunpack.c.l.b16 %v24
    %v206 = vunpack.c.h.b16 %v24
    %v207 = vpack.c.b16 %v201, %v199
    %v208 = vpack.c.b16 %v202, %v200
    %v209 = vpack.c.b16 %v205, %v203
    %v210 = vpack.c.b16 %v206, %v204
    %v343 = vunpack.c.l.b16 %v25
    %v344 = vunpack.c.h.b16 %v25
    %v345 = vunpack.c.l.b16 %v26
    %v346 = vunpack.c.h.b16 %v26
    %v347 = vunpack.c.l.b16 %v27
    %v348 = vunpack.c.h.b16 %v27
    %v349 = vunpack.c.l.b16 %v28
    %v350 = vunpack.c.h.b16 %v28
    %v351 = vunpack.c.l.b16 %v29
    %v352 = vunpack.c.h.b16 %v29
    %v353 = vunpack.c.l.b16 %v30
    %v354 = vunpack.c.h.b16 %v30
    %v355 = vunpack.c.l.b16 %v31
    %v356 = vunpack.c.h.b16 %v31
    %v357 = vunpack.c.l.b16 %v32
    %v358 = vunpack.c.h.b16 %v32
    %v359 = vunpack.c.l.b16 %v33
    %v360 = vunpack.c.h.b16 %v33
    %v361 = vunpack.c.l.b16 %v34
    %v362 = vunpack.c.h.b16 %v34
    %v363 = vunpack.c.l.b16 %v35
    %v364 = vunpack.c.h.b16 %v35
    %v365 = vunpack.c.l.b16 %v36
    %v366 = vunpack.c.h.b16 %v36
    %v367 = vunpack.c.l.b16 %v37
    %v368 = vunpack.c.h.b16 %v37
    %v369 = vunpack.c.l.b16 %v38
    %v370 = vunpack.c.h.b16 %v38
    %v371 = vunpack.c.l.b16 %v39
    %v372 = vunpack.c.h.b16 %v39
    %v373 = vunpack.c.l.b16 %v40
    %v374 = vunpack.c.h.b16 %v40
    %v375 = vunpack.c.l.b16 %v41
    %v376 = vunpack.c.h.b16 %v41
    %v377 = vunpack.c.l.b16 %v42
    %v378 = vunpack.c.h.b16 %v42
    %v379 = vunpack.c.l.b16 %v43
    %v380 = vunpack.c.h.b16 %v43
    %v381 = vunpack.c.l.b16 %v44
    %v382 = vunpack.c.h.b16 %v44
    %v383 = vunpack.c.l.b16 %v45
    %v384 = vunpack.c.h.b16 %v45
    %v385 = vunpack.c.l.b16 %v46
    %v386 = vunpack.c.h.b16 %v46
    %v387 = vunpack.c.l.b16 %v47
    %v388 = vunpack.c.h.b16 %v47
    %v389 = vunpack.c.l.b16 %v48
    %v390 = vunpack.c.h.b16 %v48
    %v391 = vunpack.c.l.b16 %v49
    %v392 = vunpack.c.h.b16 %v49
    %v393 = vunpack.c.l.b16 %v50
    %v394 = vunpack.c.h.b16 %v50
    %v395 = vunpack.c.l.b16 %v51
    %v396 = vunpack.c.h.b16 %v51
    %v397 = vunpack.c.l.b16 %v52
    %v398 = vunpack.c.h.b16 %v52
    %v399 = vunpack.c.l.b16 %v53
    %v400 = vunpack.c.h.b16 %v53
    %v401 = vunpack.c.l.b16 %v54
    %v402 = vunpack.c.h.b16 %v54
    %v403 = vunpack.c.l.b16 %v55
    %v404 = vunpack.c.h.b16 %v55
    %v405 = vunpack.c.l.b16 %v56
    %v406 = vunpack.c.h.b16 %v56
    %v407 = vunpack.c.l.b16 %v57
    %v408 = vunpack.c.h.b16 %v57
    %v409 = vunpack.c.l.b16 %v58
    %v410 = vunpack.c.h.b16 %v58
    %v411 = vunpack.c.l.b16 %v59
    %v412 = vunpack.c.h.b16 %v59
    %v413 = vunpack.c.l.b16 %v60
    %v414 = vunpack.c.h.b16 %v60
    %v415 = vunpack.c.l.b16 %v61
    %v416 = vunpack.c.h.b16 %v61
    %v417 = vunpack.c.l.b16 %v62
    %v418 = vunpack.c.h.b16 %v62
    %v419 = vunpack.c.l.b16 %v63
    %v420 = vunpack.c.h.b16 %v63
    %v421 = vunpack.c.l.b16 %v64
    %v422 = vunpack.c.h.b16 %v64
    %v423 = vunpack.c.l.b16 %v65
    %v424 = vunpack.c.h.b16 %v65
    %v425 = vunpack.c.l.b16 %v66
    %v426 = vunpack.c.h.b16 %v66
    %v427 = vunpack.c.l.b16 %v67
    %v428 = vunpack.c.h.b16 %v67
    %v429 = vunpack.c.l.b16 %v68
    %v430 = vunpack.c.h.b16 %v68
    %v431 = vunpack.c.l.b16 %v69
    %v432 = vunpack.c.h.b16 %v69
    %v433 = vunpack.c.l.b16 %v70
    %v434 = vunpack.c.h.b16 %v70
    %v435 = vunpack.c.l.b16 %v71
    %v436 = vunpack.c.h.b16 %v71
    %v437 = vunpack.c.l.b16 %v72
    %v438 = vunpack.c.h.b16 %v72
    %v439 = vunpack.c.l.b16 %v73
    %v440 = vunpack.c.h.b16 %v73
    %v441 = vunpack.c.l.b16 %v74
    %v442 = vunpack.c.h.b16 %v74
    %v443 = vunpack.c.l.b16 %v75
    %v444 = vunpack.c.h.b16 %v75
    %v445 = vunpack.c.l.b16 %v76
    %v446 = vunpack.c.h.b16 %v76
    %v447 = vunpack.c.l.b16 %v77
    %v448 = vunpack.c.h.b16 %v77
    %v449 = vunpack.c.l.b16 %v78
    %v450 = vunpack.c.h.b16 %v78
    %v451 = vunpack.c.l.b16 %v79
    %v452 = vunpack.c.h.b16 %v79
    %v453 = vunpack.c.l.b16 %v80
    %v454 = vunpack.c.h.b16 %v80
    %v455 = vunpack.c.l.b16 %v81
    %v456 = vunpack.c.h.b16 %v81
    %v457 = vunpack.c.l.b16 %v82
    %v458 = vunpack.c.h.b16 %v82
    %v459 = vunpack.c.l.b16 %v83
    %v460 = vunpack.c.h.b16 %v83
    %v461 = vunpack.c.l.b16 %v84
    %v462 = vunpack.c.h.b16 %v84
    %v463 = vunpack.c.l.b16 %v85
    %v464 = vunpack.c.h.b16 %v85
    %v465 = vunpack.c.l.b16 %v86
    %v466 = vunpack.c.h.b16 %v86
    %v467 = vunpack.c.l.b16 %v87
    %v468 = vunpack.c.h.b16 %v87
    %v469 = vunpack.c.l.b16 %v88
    %v470 = vunpack.c.h.b16 %v88
    %v471 = vunpack.c.l.b16 %v89
    %v472 = vunpack.c.h.b16 %v89
    %v473 = vunpack.c.l.b16 %v90
    %v474 = vunpack.c.h.b16 %v90
    %v475 = vunpack.c.l.b16 %v91
    %v476 = vunpack.c.h.b16 %v91
    %v477 = vunpack.c.l.b16 %v92
    %v478 = vunpack.c.h.b16 %v92
    %v479 = vunpack.c.l.b16 %v93
    %v480 = vunpack.c.h.b16 %v93
    %v481 = vunpack.c.l.b16 %v94
    %v482 = vunpack.c.h.b16 %v94
    %v483 = vunpack.c.l.b16 %v95
    %v484 = vunpack.c.h.b16 %v95
    %v485 = vunpack.c.l.b16 %v96
    %v486 = vunpack.c.h.b16 %v96
    %v487 = vunpack.c.l.b16 %v97
    %v488 = vunpack.c.h.b16 %v97
    %v489 = vunpack.c.l.b16 %v98
    %v490 = vunpack.c.h.b16 %v98
    %v491 = vunpack.c.l.b16 %v99
    %v492 = vunpack.c.h.b16 %v99
    %v493 = vunpack.c.l.b16 %v100
    %v494 = vunpack.c.h.b16 %v100
    %v495 = vunpack.c.l.b16 %v101
    %v496 = vunpack.c.h.b16 %v101
    %v497 = vunpack.c.l.b16 %v102
    %v498 = vunpack.c.h.b16 %v102
    %v499 = vunpack.c.l.b16 %v103
    %v500 = vunpack.c.h.b16 %v103
    %v501 = vunpack.c.l.b16 %v104
    %v502 = vunpack.c.h.b16 %v104
    %v503 = vunpack.c.l.b16 %v105
    %v504 = vunpack.c.h.b16 %v105
    %v505 = vunpack.c.l.b16 %v106
    %v506 = vunpack.c.h.b16 %v106
    %v507 = vunpack.c.l.b16 %v107
    %v508 = vunpack.c.h.b16 %v107
    %v509 = vunpack.c.l.b16 %v108
    %v510 = vunpack.c.h.b16 %v108
    %v511 = vunpack.c.l.b16 %v109
    %v512 = vunpack.c.h.b16 %v109
    %v513 = vunpack.c.l.b16 %v110
    %v514 = vunpack.c.h.b16 %v110
    %v515 = vunpack.c.l.b16 %v111
    %v516 = vunpack.c.h.b16 %v111
    %v517 = vunpack.c.l.b16 %v112
    %v518 = vunpack.c.h.b16 %v112
    %v519 = vunpack.c.l.b16 %v113
    %v520 = vunpack.c.h.b16 %v113
    %v521 = vunpack.c.l.b16 %v114
    %v522 = vunpack.c.h.b16 %v114
    %v523 = vunpack.c.l.b16 %v115
    %v524 = vunpack.c.h.b16 %v115
    %v525 = vunpack.c.l.b16 %v116
    %v526 = vunpack.c.h.b16 %v116
    %v527 = vunpack.c.l.b16 %v117
    %v528 = vunpack.c.h.b16 %v117
    %v529 = vunpack.c.l.b16 %v118
    %v530 = vunpack.c.h.b16 %v118
    %v531 = vunpack.c.l.b16 %v119
    %v532 = vunpack.c.h.b16 %v119
    %v533 = vunpack.c.l.b16 %v120
    %v534 = vunpack.c.h.b16 %v120
    %v535 = vunpack.c.l.b16 %v121
    %v536 = vunpack.c.h.b16 %v121
    %v537 = vunpack.c.l.b16 %v122
    %v538 = vunpack.c.h.b16 %v122
    %v539 = vunpack.c.l.b16 %v123
    %v540 = vunpack.c.h.b16 %v123
    %v541 = vunpack.c.l.b16 %v124
    %v542 = vunpack.c.h.b16 %v124
    %v543 = vunpack.c.l.b16 %v125
    %v544 = vunpack.c.h.b16 %v125
    %v545 = vunpack.c.l.b16 %v126
    %v546 = vunpack.c.h.b16 %v126
    %v547 = vunpack.c.l.b16 %v127
    %v548 = vunpack.c.h.b16 %v127
    %v549 = vunpack.c.l.b16 %v128
    %v550 = vunpack.c.h.b16 %v128
    %v551 = vunpack.c.l.b16 %v129
    %v552 = vunpack.c.h.b16 %v129
    %v553 = vunpack.c.l.b16 %v130
    %v554 = vunpack.c.h.b16 %v130
    %v555 = vunpack.c.l.b16 %v131
    %v556 = vunpack.c.h.b16 %v131
    %v557 = vunpack.c.l.b16 %v132
    %v558 = vunpack.c.h.b16 %v132
    %v559 = vunpack.c.l.b16 %v133
    %v560 = vunpack.c.h.b16 %v133
    %v561 = vunpack.c.l.b16 %v134
    %v562 = vunpack.c.h.b16 %v134
    %v563 = vunpack.c.l.b16 %v135
    %v564 = vunpack.c.h.b16 %v135
    %v565 = vunpack.c.l.b16 %v136
    %v566 = vunpack.c.h.b16 %v136
    %v567 = vunpack.c.l.b16 %v137
    %v568 = vunpack.c.h.b16 %v137
    %v569 = vunpack.c.l.b16 %v138
    %v570 = vunpack.c.h.b16 %v138
    %v571 = vunpack.c.l.b16 %v139
    %v572 = vunpack.c.h.b16 %v139
    %v573 = vunpack.c.l.b16 %v140
    %v574 = vunpack.c.h.b16 %v140
    %v575 = vunpack.c.l.b16 %v141
    %v576 = vunpack.c.h.b16 %v141
    %v577 = vunpack.c.l.b16 %v142
    %v578 = vunpack.c.h.b16 %v142
    %v579 = vunpack.c.l.b16 %v143
    %v580 = vunpack.c.h.b16 %v143
    %v581 = vunpack.c.l.b16 %v144
    %v582 = vunpack.c.h.b16 %v144
    %v583 = vunpack.c.l.b16 %v145
    %v584 = vunpack.c.h.b16 %v145
    %v585 = vunpack.c.l.b16 %v146
    %v586 = vunpack.c.h.b16 %v146
    %v587 = vunpack.c.l.b16 %v147
    %v588 = vunpack.c.h.b16 %v147
    %v589 = vunpack.c.l.b16 %v148
    %v590 = vunpack.c.h.b16 %v148
    %v591 = vunpack.c.l.b16 %v149
    %v592 = vunpack.c.h.b16 %v149
    %v593 = vunpack.c.l.b16 %v150
    %v594 = vunpack.c.h.b16 %v150
    %v595 = vunpack.c.l.b16 %v151
    %v596 = vunpack.c.h.b16 %v151
    %v597 = vunpack.c.l.b16 %v152
    %v598 = vunpack.c.h.b16 %v152
    %v599 = vpack.c.b16 %v351, %v343
    %v600 = vpack.c.b16 %v352, %v344
    %v601 = vpack.c.b16 %v353, %v345
    %v602 = vpack.c.b16 %v354, %v346
    %v603 = vpack.c.b16 %v355, %v347
    %v604 = vpack.c.b16 %v356, %v348
    %v605 = vpack.c.b16 %v357, %v349
    %v606 = vpack.c.b16 %v358, %v350
    %v607 = vpack.c.b16 %v367, %v359
    %v608 = vpack.c.b16 %v368, %v360
    %v609 = vpack.c.b16 %v369, %v361
    %v610 = vpack.c.b16 %v370, %v362
    %v611 = vpack.c.b16 %v371, %v363
    %v612 = vpack.c.b16 %v372, %v364
    %v613 = vpack.c.b16 %v373, %v365
    %v614 = vpack.c.b16 %v374, %v366
    %v615 = vpack.c.b16 %v383, %v375
    %v616 = vpack.c.b16 %v384, %v376
    %v617 = vpack.c.b16 %v385, %v377
    %v618 = vpack.c.b16 %v386, %v378
    %v619 = vpack.c.b16 %v387, %v379
    %v620 = vpack.c.b16 %v388, %v380
    %v621 = vpack.c.b16 %v389, %v381
    %v622 = vpack.c.b16 %v390, %v382
    %v623 = vpack.c.b16 %v399, %v391
    %v624 = vpack.c.b16 %v400, %v392
    %v625 = vpack.c.b16 %v401, %v393
    %v626 = vpack.c.b16 %v402, %v394
    %v627 = vpack.c.b16 %v403, %v395
    %v628 = vpack.c.b16 %v404, %v396
    %v629 = vpack.c.b16 %v405, %v397
    %v630 = vpack.c.b16 %v406, %v398
    %v631 = vpack.c.b16 %v415, %v407
    %v632 = vpack.c.b16 %v416, %v408
    %v633 = vpack.c.b16 %v417, %v409
    %v634 = vpack.c.b16 %v418, %v410
    %v635 = vpack.c.b16 %v419, %v411
    %v636 = vpack.c.b16 %v420, %v412
    %v637 = vpack.c.b16 %v421, %v413
    %v638 = vpack.c.b16 %v422, %v414
    %v639 = vpack.c.b16 %v431, %v423
    %v640 = vpack.c.b16 %v432, %v424
    %v641 = vpack.c.b16 %v433, %v425
    %v642 = vpack.c.b16 %v434, %v426
    %v643 = vpack.c.b16 %v435, %v427
    %v644 = vpack.c.b16 %v436, %v428
    %v645 = vpack.c.b16 %v437, %v429
    %v646 = vpack.c.b16 %v438, %v430
    %v647 = vpack.c.b16 %v447, %v439
    %v648 = vpack.c.b16 %v448, %v440
    %v649 = vpack.c.b16 %v449, %v441
    %v650 = vpack.c.b16 %v450, %v442
    %v651 = vpack.c.b16 %v451, %v443
    %v652 = vpack.c.b16 %v452, %v444
    %v653 = vpack.c.b16 %v453, %v445
    %v654 = vpack.c.b16 %v454, %v446
    %v655 = vpack.c.b16 %v463, %v455
    %v656 = vpack.c.b16 %v464, %v456
    %v657 = vpack.c.b16 %v465, %v457
    %v658 = vpack.c.b16 %v466, %v458
    %v659 = vpack.c.b16 %v467, %v459
    %v660 = vpack.c.b16 %v468, %v460
    %v661 = vpack.c.b16 %v469, %v461
    %v662 = vpack.c.b16 %v470, %v462
    %v663 = vpack.c.b16 %v479, %v471
    %v664 = vpack.c.b16 %v480, %v472
    %v665 = vpack.c.b16 %v481, %v473
    %v666 = vpack.c.b16 %v482, %v474
    %v667 = vpack.c.b16 %v483, %v475
    %v668 = vpack.c.b16 %v484, %v476
    %v669 = vpack.c.b16 %v485, %v477
    %v670 = vpack.c.b16 %v486, %v478
    %v671 = vpack.c.b16 %v495, %v487
    %v672 = vpack.c.b16 %v496, %v488
    %v673 = vpack.c.b16 %v497, %v489
    %v674 = vpack.c.b16 %v498, %v490
    %v675 = vpack.c.b16 %v499, %v491
    %v676 = vpack.c.b16 %v500, %v492
    %v677 = vpack.c.b16 %v501, %v493
    %v678 = vpack.c.b16 %v502, %v494
    %v679 = vpack.c.b16 %v511, %v503
    %v680 = vpack.c.b16 %v512, %v504
    %v681 = vpack.c.b16 %v513, %v505
    %v682 = vpack.c.b16 %v514, %v506
    %v683 = vpack.c.b16 %v515, %v507
    %v684 = vpack.c.b16 %v516, %v508
    %v685 = vpack.c.b16 %v517, %v509
    %v686 = vpack.c.b16 %v518, %v510
    %v687 = vpack.c.b16 %v527, %v519
    %v688 = vpack.c.b16 %v528, %v520
    %v689 = vpack.c.b16 %v529, %v521
    %v690 = vpack.c.b16 %v530, %v522
    %v691 = vpack.c.b16 %v531, %v523
    %v692 = vpack.c.b16 %v532, %v524
    %v693 = vpack.c.b16 %v533, %v525
    %v694 = vpack.c.b16 %v534, %v526
    %v695 = vpack.c.b16 %v543, %v535
    %v696 = vpack.c.b16 %v544, %v536
    %v697 = vpack.c.b16 %v545, %v537
    %v698 = vpack.c.b16 %v546, %v538
    %v699 = vpack.c.b16 %v547, %v539
    %v700 = vpack.c.b16 %v548, %v540
    %v701 = vpack.c.b16 %v549, %v541
    %v702 = vpack.c.b16 %v550, %v542
    %v703 = vpack.c.b16 %v559, %v551
    %v704 = vpack.c.b16 %v560, %v552
    %v705 = vpack.c.b16 %v561, %v553
    %v706 = vpack.c.b16 %v562, %v554
    %v707 = vpack.c.b16 %v563, %v555
    %v708 = vpack.c.b16 %v564, %v556
    %v709 = vpack.c.b16 %v565, %v557
    %v710 = vpack.c.b16 %v566, %v558
    %v711 = vpack.c.b16 %v575, %v567
    %v712 = vpack.c.b16 %v576, %v568
    %v713 = vpack.c.b16 %v577, %v569
    %v714 = vpack.c.b16 %v578, %v570
    %v715 = vpack.c.b16 %v579, %v571
    %v716 = vpack.c.b16 %v580, %v572
    %v717 = vpack.c.b16 %v581, %v573
    %v718 = vpack.c.b16 %v582, %v574
    %v719 = vpack.c.b16 %v591, %v583
    %v720 = vpack.c.b16 %v592, %v584
    %v721 = vpack.c.b16 %v593, %v585
    %v722 = vpack.c.b16 %v594, %v586
    %v723 = vpack.c.b16 %v595, %v587
    %v724 = vpack.c.b16 %v596, %v588
    %v725 = vpack.c.b16 %v597, %v589
    %v726 = vpack.c.b16 %v598, %v590
    %855 = vmatprep.subr.bf16.mxu0 %v656
    %856 = vmatpush1.bf16.msra.mxu0 %v655
    %857 = vmatprep.subr.bf16.mxu0 %v648
    %858 = vmatpush1.bf16.msra.mxu0 %v647
    %859 = vmatprep.subr.bf16.mxu0 %v640
    %860 = vmatpush1.bf16.msra.mxu0 %v639
    %861 = vmatprep.subr.bf16.mxu0 %v632
    %862 = vmatpush1.bf16.msra.mxu0 %v631
    %863 = vmatprep.subr.bf16.mxu0 %v624
    %864 = vmatpush1.bf16.msra.mxu0 %v623
    %865 = vmatprep.subr.bf16.mxu0 %v616
    %866 = vmatpush1.bf16.msra.mxu0 %v615
    %867 = vmatprep.subr.bf16.mxu0 %v608
    %868 = vmatpush1.bf16.msra.mxu0 %v607
    %869 = vmatprep.subr.bf16.mxu0 %v600
    %870 = vmatpush1.bf16.msra.mxu0 %v599
    %871 = vmatprep.subr.bf16.mxu0 %v720
    %872 = vmatpush2.bf16.msra.mxu0 %v719
    %873 = vmatprep.subr.bf16.mxu0 %v712
    %874 = vmatpush2.bf16.msra.mxu0 %v711
    %875 = vmatprep.subr.bf16.mxu0 %v704
    %876 = vmatpush2.bf16.msra.mxu0 %v703
    %877 = vmatprep.subr.bf16.mxu0 %v696
    %878 = vmatpush2.bf16.msra.mxu0 %v695
    %879 = vmatprep.subr.bf16.mxu0 %v688
    %880 = vmatpush2.bf16.msra.mxu0 %v687
    %881 = vmatprep.subr.bf16.mxu0 %v680
    %882 = vmatpush2.bf16.msra.mxu0 %v679
    %883 = vmatprep.subr.bf16.mxu0 %v672
    %884 = vmatpush2.bf16.msra.mxu0 %v671
    %885 = vmatprep.subr.bf16.mxu0 %v664
    %886 = vmatpush2.bf16.msra.mxu0 %v663
    %887 = vmatprep.mubr.bf16.mxu0 %v208
    %888 = vmatmul.mubr.bf16.gmra.mxu0 %v207
    %v889 = vpop.f32.mrf.mxu0
    %v890 = vadd.f32 %v158, %v889
    %v891 = vpop.f32.mrf.mxu0
    %v892 = vadd.f32 %v162, %v891
    %v893 = vpop.f32.mrf.mxu0
    %v894 = vadd.f32 %v158, %v893
    %v895 = vpop.f32.mrf.mxu0
    %v896 = vadd.f32 %v162, %v895
    %897 = vmatprep.mubr.bf16.mxu0 %v210
    %898 = vmatmul.mubr.bf16.gmra.mxu0 %v209
    %v899 = vpop.f32.mrf.mxu0
    %v900 = vadd.f32 %v158, %v899
    %v901 = vpop.f32.mrf.mxu0
    %v902 = vadd.f32 %v162, %v901
    %v903 = vpop.f32.mrf.mxu0
    %v904 = vadd.f32 %v158, %v903
    %v905 = vpop.f32.mrf.mxu0
    %v906 = vadd.f32 %v162, %v905
    %907 = vdwg.mxu0
    %908 = vmatprep.subr.bf16.mxu0 %v658
    %909 = vmatpush1.bf16.msra.mxu0 %v657
    %910 = vmatprep.subr.bf16.mxu0 %v650
    %911 = vmatpush1.bf16.msra.mxu0 %v649
    %912 = vmatprep.subr.bf16.mxu0 %v642
    %913 = vmatpush1.bf16.msra.mxu0 %v641
    %914 = vmatprep.subr.bf16.mxu0 %v634
    %915 = vmatpush1.bf16.msra.mxu0 %v633
    %916 = vmatprep.subr.bf16.mxu0 %v626
    %917 = vmatpush1.bf16.msra.mxu0 %v625
    %918 = vmatprep.subr.bf16.mxu0 %v618
    %919 = vmatpush1.bf16.msra.mxu0 %v617
    %920 = vmatprep.subr.bf16.mxu0 %v610
    %921 = vmatpush1.bf16.msra.mxu0 %v609
    %922 = vmatprep.subr.bf16.mxu0 %v602
    %923 = vmatpush1.bf16.msra.mxu0 %v601
    %924 = vmatprep.subr.bf16.mxu0 %v722
    %925 = vmatpush2.bf16.msra.mxu0 %v721
    %926 = vmatprep.subr.bf16.mxu0 %v714
    %927 = vmatpush2.bf16.msra.mxu0 %v713
    %928 = vmatprep.subr.bf16.mxu0 %v706
    %929 = vmatpush2.bf16.msra.mxu0 %v705
    %930 = vmatprep.subr.bf16.mxu0 %v698
    %931 = vmatpush2.bf16.msra.mxu0 %v697
    %932 = vmatprep.subr.bf16.mxu0 %v690
    %933 = vmatpush2.bf16.msra.mxu0 %v689
    %934 = vmatprep.subr.bf16.mxu0 %v682
    %935 = vmatpush2.bf16.msra.mxu0 %v681
    %936 = vmatprep.subr.bf16.mxu0 %v674
    %937 = vmatpush2.bf16.msra.mxu0 %v673
    %938 = vmatprep.subr.bf16.mxu0 %v666
    %939 = vmatpush2.bf16.msra.mxu0 %v665
    %940 = vmatprep.mubr.bf16.mxu0 %v208
    %941 = vmatmul.mubr.bf16.gmra.mxu0 %v207
    %v942 = vpop.f32.mrf.mxu0
    %v943 = vadd.f32 %v166, %v942
    %v944 = vpop.f32.mrf.mxu0
    %v945 = vadd.f32 %v170, %v944
    %v946 = vpop.f32.mrf.mxu0
    %v947 = vadd.f32 %v166, %v946
    %v948 = vpop.f32.mrf.mxu0
    %v949 = vadd.f32 %v170, %v948
    %950 = vmatprep.mubr.bf16.mxu0 %v210
    %951 = vmatmul.mubr.bf16.gmra.mxu0 %v209
    %v952 = vpop.f32.mrf.mxu0
    %v953 = vadd.f32 %v166, %v952
    %v954 = vpop.f32.mrf.mxu0
    %v955 = vadd.f32 %v170, %v954
    %v956 = vpop.f32.mrf.mxu0
    %v957 = vadd.f32 %v166, %v956
    %v958 = vpop.f32.mrf.mxu0
    %v959 = vadd.f32 %v170, %v958
    %960 = vdwg.mxu0
    %961 = vmatprep.subr.bf16.mxu0 %v660
    %962 = vmatpush1.bf16.msra.mxu0 %v659
    %963 = vmatprep.subr.bf16.mxu0 %v652
    %964 = vmatpush1.bf16.msra.mxu0 %v651
    %965 = vmatprep.subr.bf16.mxu0 %v644
    %966 = vmatpush1.bf16.msra.mxu0 %v643
    %967 = vmatprep.subr.bf16.mxu0 %v636
    %968 = vmatpush1.bf16.msra.mxu0 %v635
    %969 = vmatprep.subr.bf16.mxu0 %v628
    %970 = vmatpush1.bf16.msra.mxu0 %v627
    %971 = vmatprep.subr.bf16.mxu0 %v620
    %972 = vmatpush1.bf16.msra.mxu0 %v619
    %973 = vmatprep.subr.bf16.mxu0 %v612
    %974 = vmatpush1.bf16.msra.mxu0 %v611
    %975 = vmatprep.subr.bf16.mxu0 %v604
    %976 = vmatpush1.bf16.msra.mxu0 %v603
    %977 = vmatprep.subr.bf16.mxu0 %v724
    %978 = vmatpush2.bf16.msra.mxu0 %v723
    %979 = vmatprep.subr.bf16.mxu0 %v716
    %980 = vmatpush2.bf16.msra.mxu0 %v715
    %981 = vmatprep.subr.bf16.mxu0 %v708
    %982 = vmatpush2.bf16.msra.mxu0 %v707
    %983 = vmatprep.subr.bf16.mxu0 %v700
    %984 = vmatpush2.bf16.msra.mxu0 %v699
    %985 = vmatprep.subr.bf16.mxu0 %v692
    %986 = vmatpush2.bf16.msra.mxu0 %v691
    %987 = vmatprep.subr.bf16.mxu0 %v684
    %988 = vmatpush2.bf16.msra.mxu0 %v683
    %989 = vmatprep.subr.bf16.mxu0 %v676
    %990 = vmatpush2.bf16.msra.mxu0 %v675
    %991 = vmatprep.subr.bf16.mxu0 %v668
    %992 = vmatpush2.bf16.msra.mxu0 %v667
    %993 = vmatprep.mubr.bf16.mxu0 %v208
    %994 = vmatmul.mubr.bf16.gmra.mxu0 %v207
    %v995 = vpop.f32.mrf.mxu0
    %v996 = vadd.f32 %v174, %v995
    %v997 = vpop.f32.mrf.mxu0
    %v998 = vadd.f32 %v178, %v997
    %v999 = vpop.f32.mrf.mxu0
    %v1000 = vadd.f32 %v174, %v999
    %v1001 = vpop.f32.mrf.mxu0
    %v1002 = vadd.f32 %v178, %v1001
    %1003 = vmatprep.mubr.bf16.mxu0 %v210
    %1004 = vmatmul.mubr.bf16.gmra.mxu0 %v209
    %v1005 = vpop.f32.mrf.mxu0
    %v1006 = vadd.f32 %v174, %v1005
    %v1007 = vpop.f32.mrf.mxu0
    %v1008 = vadd.f32 %v178, %v1007
    %v1009 = vpop.f32.mrf.mxu0
    %v1010 = vadd.f32 %v174, %v1009
    %v1011 = vpop.f32.mrf.mxu0
    %v1012 = vadd.f32 %v178, %v1011
    %1013 = vdwg.mxu0
    %1014 = vmatprep.subr.bf16.mxu0 %v662
    %1015 = vmatpush1.bf16.msra.mxu0 %v661
    %1016 = vmatprep.subr.bf16.mxu0 %v654
    %1017 = vmatpush1.bf16.msra.mxu0 %v653
    %1018 = vmatprep.subr.bf16.mxu0 %v646
    %1019 = vmatpush1.bf16.msra.mxu0 %v645
    %1020 = vmatprep.subr.bf16.mxu0 %v638
    %1021 = vmatpush1.bf16.msra.mxu0 %v637
    %1022 = vmatprep.subr.bf16.mxu0 %v630
    %1023 = vmatpush1.bf16.msra.mxu0 %v629
    %1024 = vmatprep.subr.bf16.mxu0 %v622
    %1025 = vmatpush1.bf16.msra.mxu0 %v621
    %1026 = vmatprep.subr.bf16.mxu0 %v614
    %1027 = vmatpush1.bf16.msra.mxu0 %v613
    %1028 = vmatprep.subr.bf16.mxu0 %v606
    %1029 = vmatpush1.bf16.msra.mxu0 %v605
    %1030 = vmatprep.subr.bf16.mxu0 %v726
    %1031 = vmatpush2.bf16.msra.mxu0 %v725
    %1032 = vmatprep.subr.bf16.mxu0 %v718
    %1033 = vmatpush2.bf16.msra.mxu0 %v717
    %1034 = vmatprep.subr.bf16.mxu0 %v710
    %1035 = vmatpush2.bf16.msra.mxu0 %v709
    %1036 = vmatprep.subr.bf16.mxu0 %v702
    %1037 = vmatpush2.bf16.msra.mxu0 %v701
    %1038 = vmatprep.subr.bf16.mxu0 %v694
    %1039 = vmatpush2.bf16.msra.mxu0 %v693
    %1040 = vmatprep.subr.bf16.mxu0 %v686
    %1041 = vmatpush2.bf16.msra.mxu0 %v685
    %1042 = vmatprep.subr.bf16.mxu0 %v678
    %1043 = vmatpush2.bf16.msra.mxu0 %v677
    %1044 = vmatprep.subr.bf16.mxu0 %v670
    %1045 = vmatpush2.bf16.msra.mxu0 %v669
    %1046 = vmatprep.mubr.bf16.mxu0 %v208
    %1047 = vmatmul.mubr.bf16.gmra.mxu0 %v207
    %v1048 = vpop.f32.mrf.mxu0
    %v1049 = vadd.f32 %v182, %v1048
    %v1050 = vpop.f32.mrf.mxu0
    %v1051 = vadd.f32 %v186, %v1050
    %v1052 = vpop.f32.mrf.mxu0
    %v1053 = vadd.f32 %v182, %v1052
    %v1054 = vpop.f32.mrf.mxu0
    %v1055 = vadd.f32 %v186, %v1054
    %1056 = vmatprep.mubr.bf16.mxu0 %v210
    %1057 = vmatmul.mubr.bf16.gmra.mxu0 %v209
    %v1058 = vpop.f32.mrf.mxu0
    %v1059 = vadd.f32 %v182, %v1058
    %v1060 = vpop.f32.mrf.mxu0
    %v1061 = vadd.f32 %v186, %v1060
    %v1062 = vpop.f32.mrf.mxu0
    %v1063 = vadd.f32 %v182, %v1062
    %v1064 = vpop.f32.mrf.mxu0
    %v1065 = vadd.f32 %v186, %v1064
    %1066 = vdwg.mxu0
    %v1067 = vmax.f32 %v890, 0.0
    %v1068 = vmax.f32 %v892, 0.0
    %v1069 = vmax.f32 %v943, 0.0
    %v1070 = vmax.f32 %v945, 0.0
    %v1071 = vmax.f32 %v996, 0.0
    %v1072 = vmax.f32 %v998, 0.0
    %v1073 = vmax.f32 %v1049, 0.0
    %v1074 = vmax.f32 %v1051, 0.0
    %v1075 = vmax.f32 %v894, 0.0
    %v1076 = vmax.f32 %v896, 0.0
    %v1077 = vmax.f32 %v947, 0.0
    %v1078 = vmax.f32 %v949, 0.0
    %v1079 = vmax.f32 %v1000, 0.0
    %v1080 = vmax.f32 %v1002, 0.0
    %v1081 = vmax.f32 %v1053, 0.0
    %v1082 = vmax.f32 %v1055, 0.0
    %v1083 = vmax.f32 %v900, 0.0
    %v1084 = vmax.f32 %v902, 0.0
    %v1085 = vmax.f32 %v953, 0.0
    %v1086 = vmax.f32 %v955, 0.0
    %v1087 = vmax.f32 %v1006, 0.0
    %v1088 = vmax.f32 %v1008, 0.0
    %v1089 = vmax.f32 %v1059, 0.0
    %v1090 = vmax.f32 %v1061, 0.0
    %v1091 = vmax.f32 %v904, 0.0
    %v1092 = vmax.f32 %v906, 0.0
    %v1093 = vmax.f32 %v957, 0.0
    %v1094 = vmax.f32 %v959, 0.0
    %v1095 = vmax.f32 %v1010, 0.0
    %v1096 = vmax.f32 %v1012, 0.0
    %v1097 = vmax.f32 %v1063, 0.0
    %v1098 = vmax.f32 %v1065, 0.0
    %v1099 = vpack.c.bf16 %v1075, %v1067
    %v1100 = vpack.c.bf16 %v1076, %v1068
    %v1101 = vpack.c.bf16 %v1077, %v1069
    %v1102 = vpack.c.bf16 %v1078, %v1070
    %v1103 = vpack.c.bf16 %v1079, %v1071
    %v1104 = vpack.c.bf16 %v1080, %v1072
    %v1105 = vpack.c.bf16 %v1081, %v1073
    %v1106 = vpack.c.bf16 %v1082, %v1074
    %v1107 = vpack.c.bf16 %v1091, %v1083
    %v1108 = vpack.c.bf16 %v1092, %v1084
    %v1109 = vpack.c.bf16 %v1093, %v1085
    %v1110 = vpack.c.bf16 %v1094, %v1086
    %v1111 = vpack.c.bf16 %v1095, %v1087
    %v1112 = vpack.c.bf16 %v1096, %v1088
    %v1113 = vpack.c.bf16 %v1097, %v1089
    %v1114 = vpack.c.bf16 %v1098, %v1090
    %v1115 = vld [vmem:[%s3] sm:$0xff]
    %v1116 = vld [vmem:[%s3 + $0x8] sm:$0xff]
    %v1117 = vld [vmem:[%s3 + $0x10] sm:$0xff]
    %v1118 = vld [vmem:[%s3 + $0x18] sm:$0xff]
    %v1119 = vld [vmem:[%s3 + $0x20] sm:$0xff]
    %v1120 = vld [vmem:[%s3 + $0x28] sm:$0xff]
    %v1121 = vld [vmem:[%s3 + $0x30] sm:$0xff]
    %v1122 = vld [vmem:[%s3 + $0x38] sm:$0xff]
    %v1123 = vld [vmem:[%s3 + $0x40] sm:$0xff]
    %v1124 = vld [vmem:[%s3 + $0x48] sm:$0xff]
    %v1125 = vld [vmem:[%s3 + $0x50] sm:$0xff]
    %v1126 = vld [vmem:[%s3 + $0x58] sm:$0xff]
    %v1127 = vld [vmem:[%s3 + $0x60] sm:$0xff]
    %v1128 = vld [vmem:[%s3 + $0x68] sm:$0xff]
    %v1129 = vld [vmem:[%s3 + $0x70] sm:$0xff]
    %v1130 = vld [vmem:[%s3 + $0x78] sm:$0xff]
    %v1131 = vld [vmem:[%s3 + $0x80] sm:$0xff]
    %v1132 = vld [vmem:[%s3 + $0x88] sm:$0xff]
    %v1133 = vld [vmem:[%s3 + $0x90] sm:$0xff]
    %v1134 = vld [vmem:[%s3 + $0x98] sm:$0xff]
    %v1135 = vld [vmem:[%s3 + $0xa0] sm:$0xff]
    %v1136 = vld [vmem:[%s3 + $0xa8] sm:$0xff]
    %v1137 = vld [vmem:[%s3 + $0xb0] sm:$0xff]
    %v1138 = vld [vmem:[%s3 + $0xb8] sm:$0xff]
    %v1139 = vld [vmem:[%s3 + $0xc0] sm:$0xff]
    %v1140 = vld [vmem:[%s3 + $0xc8] sm:$0xff]
    %v1141 = vld [vmem:[%s3 + $0xd0] sm:$0xff]
    %v1142 = vld [vmem:[%s3 + $0xd8] sm:$0xff]
    %v1143 = vld [vmem:[%s3 + $0xe0] sm:$0xff]
    %v1144 = vld [vmem:[%s3 + $0xe8] sm:$0xff]
    %v1145 = vld [vmem:[%s3 + $0xf0] sm:$0xff]
    %v1146 = vld [vmem:[%s3 + $0xf8] sm:$0xff]
    %v1147 = vld [vmem:[%s3 + $0x100] sm:$0xff]
    %v1148 = vld [vmem:[%s3 + $0x108] sm:$0xff]
    %v1149 = vld [vmem:[%s3 + $0x110] sm:$0xff]
    %v1150 = vld [vmem:[%s3 + $0x118] sm:$0xff]
    %v1151 = vld [vmem:[%s3 + $0x120] sm:$0xff]
    %v1152 = vld [vmem:[%s3 + $0x128] sm:$0xff]
    %v1153 = vld [vmem:[%s3 + $0x130] sm:$0xff]
    %v1154 = vld [vmem:[%s3 + $0x138] sm:$0xff]
    %v1155 = vld [vmem:[%s3 + $0x140] sm:$0xff]
    %v1156 = vld [vmem:[%s3 + $0x148] sm:$0xff]
    %v1157 = vld [vmem:[%s3 + $0x150] sm:$0xff]
    %v1158 = vld [vmem:[%s3 + $0x158] sm:$0xff]
    %v1159 = vld [vmem:[%s3 + $0x160] sm:$0xff]
    %v1160 = vld [vmem:[%s3 + $0x168] sm:$0xff]
    %v1161 = vld [vmem:[%s3 + $0x170] sm:$0xff]
    %v1162 = vld [vmem:[%s3 + $0x178] sm:$0xff]
    %v1163 = vld [vmem:[%s3 + $0x180] sm:$0xff]
    %v1164 = vld [vmem:[%s3 + $0x188] sm:$0xff]
    %v1165 = vld [vmem:[%s3 + $0x190] sm:$0xff]
    %v1166 = vld [vmem:[%s3 + $0x198] sm:$0xff]
    %v1167 = vld [vmem:[%s3 + $0x1a0] sm:$0xff]
    %v1168 = vld [vmem:[%s3 + $0x1a8] sm:$0xff]
    %v1169 = vld [vmem:[%s3 + $0x1b0] sm:$0xff]
    %v1170 = vld [vmem:[%s3 + $0x1b8] sm:$0xff]
    %v1171 = vld [vmem:[%s3 + $0x1c0] sm:$0xff]
    %v1172 = vld [vmem:[%s3 + $0x1c8] sm:$0xff]
    %v1173 = vld [vmem:[%s3 + $0x1d0] sm:$0xff]
    %v1174 = vld [vmem:[%s3 + $0x1d8] sm:$0xff]
    %v1175 = vld [vmem:[%s3 + $0x1e0] sm:$0xff]
    %v1176 = vld [vmem:[%s3 + $0x1e8] sm:$0xff]
    %v1177 = vld [vmem:[%s3 + $0x1f0] sm:$0xff]
    %v1178 = vld [vmem:[%s3 + $0x1f8] sm:$0xff]
    %v1179 = vld [vmem:[%s3 + $0x200] sm:$0xff]
    %v1180 = vld [vmem:[%s3 + $0x208] sm:$0xff]
    %v1181 = vld [vmem:[%s3 + $0x210] sm:$0xff]
    %v1182 = vld [vmem:[%s3 + $0x218] sm:$0xff]
    %v1183 = vld [vmem:[%s3 + $0x220] sm:$0xff]
    %v1184 = vld [vmem:[%s3 + $0x228] sm:$0xff]
    %v1185 = vld [vmem:[%s3 + $0x230] sm:$0xff]
    %v1186 = vld [vmem:[%s3 + $0x238] sm:$0xff]
    %v1187 = vld [vmem:[%s3 + $0x240] sm:$0xff]
    %v1188 = vld [vmem:[%s3 + $0x248] sm:$0xff]
    %v1189 = vld [vmem:[%s3 + $0x250] sm:$0xff]
    %v1190 = vld [vmem:[%s3 + $0x258] sm:$0xff]
    %v1191 = vld [vmem:[%s3 + $0x260] sm:$0xff]
    %v1192 = vld [vmem:[%s3 + $0x268] sm:$0xff]
    %v1193 = vld [vmem:[%s3 + $0x270] sm:$0xff]
    %v1194 = vld [vmem:[%s3 + $0x278] sm:$0xff]
    %v1195 = vld [vmem:[%s3 + $0x280] sm:$0xff]
    %v1196 = vld [vmem:[%s3 + $0x288] sm:$0xff]
    %v1197 = vld [vmem:[%s3 + $0x290] sm:$0xff]
    %v1198 = vld [vmem:[%s3 + $0x298] sm:$0xff]
    %v1199 = vld [vmem:[%s3 + $0x2a0] sm:$0xff]
    %v1200 = vld [vmem:[%s3 + $0x2a8] sm:$0xff]
    %v1201 = vld [vmem:[%s3 + $0x2b0] sm:$0xff]
    %v1202 = vld [vmem:[%s3 + $0x2b8] sm:$0xff]
    %v1203 = vld [vmem:[%s3 + $0x2c0] sm:$0xff]
    %v1204 = vld [vmem:[%s3 + $0x2c8] sm:$0xff]
    %v1205 = vld [vmem:[%s3 + $0x2d0] sm:$0xff]
    %v1206 = vld [vmem:[%s3 + $0x2d8] sm:$0xff]
    %v1207 = vld [vmem:[%s3 + $0x2e0] sm:$0xff]
    %v1208 = vld [vmem:[%s3 + $0x2e8] sm:$0xff]
    %v1209 = vld [vmem:[%s3 + $0x2f0] sm:$0xff]
    %v1210 = vld [vmem:[%s3 + $0x2f8] sm:$0xff]
    %v1211 = vld [vmem:[%s3 + $0x300] sm:$0xff]
    %v1212 = vld [vmem:[%s3 + $0x308] sm:$0xff]
    %v1213 = vld [vmem:[%s3 + $0x310] sm:$0xff]
    %v1214 = vld [vmem:[%s3 + $0x318] sm:$0xff]
    %v1215 = vld [vmem:[%s3 + $0x320] sm:$0xff]
    %v1216 = vld [vmem:[%s3 + $0x328] sm:$0xff]
    %v1217 = vld [vmem:[%s3 + $0x330] sm:$0xff]
    %v1218 = vld [vmem:[%s3 + $0x338] sm:$0xff]
    %v1219 = vld [vmem:[%s3 + $0x340] sm:$0xff]
    %v1220 = vld [vmem:[%s3 + $0x348] sm:$0xff]
    %v1221 = vld [vmem:[%s3 + $0x350] sm:$0xff]
    %v1222 = vld [vmem:[%s3 + $0x358] sm:$0xff]
    %v1223 = vld [vmem:[%s3 + $0x360] sm:$0xff]
    %v1224 = vld [vmem:[%s3 + $0x368] sm:$0xff]
    %v1225 = vld [vmem:[%s3 + $0x370] sm:$0xff]
    %v1226 = vld [vmem:[%s3 + $0x378] sm:$0xff]
    %v1227 = vld [vmem:[%s3 + $0x380] sm:$0xff]
    %v1228 = vld [vmem:[%s3 + $0x388] sm:$0xff]
    %v1229 = vld [vmem:[%s3 + $0x390] sm:$0xff]
    %v1230 = vld [vmem:[%s3 + $0x398] sm:$0xff]
    %v1231 = vld [vmem:[%s3 + $0x3a0] sm:$0xff]
    %v1232 = vld [vmem:[%s3 + $0x3a8] sm:$0xff]
    %v1233 = vld [vmem:[%s3 + $0x3b0] sm:$0xff]
    %v1234 = vld [vmem:[%s3 + $0x3b8] sm:$0xff]
    %v1235 = vld [vmem:[%s3 + $0x3c0] sm:$0xff]
    %v1236 = vld [vmem:[%s3 + $0x3c8] sm:$0xff]
    %v1237 = vld [vmem:[%s3 + $0x3d0] sm:$0xff]
    %v1238 = vld [vmem:[%s3 + $0x3d8] sm:$0xff]
    %v1239 = vld [vmem:[%s3 + $0x3e0] sm:$0xff]
    %v1240 = vld [vmem:[%s3 + $0x3e8] sm:$0xff]
    %v1241 = vld [vmem:[%s3 + $0x3f0] sm:$0xff]
    %v1242 = vld [vmem:[%s3 + $0x3f8] sm:$0xff]
    %v1243 = vld [vmem:[%s4] sm:$0x3]
    %v1245 = vlaneseq
    %v1246 = vshrl.u32 %v1245, 7
    %v1247 = vsub.s32 0, %v1246
    %v1248 = vrot.slane %v1243, %v1247
    %v1249 = vlaneseq
    %v1250 = vshrl.u32 %v1249, 7
    %v1251 = vsub.s32 1, %v1250
    %v1252 = vrot.slane %v1243, %v1251
    %v1383 = vunpack.c.l.b16 %v1115
    %v1384 = vunpack.c.h.b16 %v1115
    %v1385 = vunpack.c.l.b16 %v1116
    %v1386 = vunpack.c.h.b16 %v1116
    %v1387 = vunpack.c.l.b16 %v1117
    %v1388 = vunpack.c.h.b16 %v1117
    %v1389 = vunpack.c.l.b16 %v1118
    %v1390 = vunpack.c.h.b16 %v1118
    %v1391 = vunpack.c.l.b16 %v1119
    %v1392 = vunpack.c.h.b16 %v1119
    %v1393 = vunpack.c.l.b16 %v1120
    %v1394 = vunpack.c.h.b16 %v1120
    %v1395 = vunpack.c.l.b16 %v1121
    %v1396 = vunpack.c.h.b16 %v1121
    %v1397 = vunpack.c.l.b16 %v1122
    %v1398 = vunpack.c.h.b16 %v1122
    %v1399 = vunpack.c.l.b16 %v1123
    %v1400 = vunpack.c.h.b16 %v1123
    %v1401 = vunpack.c.l.b16 %v1124
    %v1402 = vunpack.c.h.b16 %v1124
    %v1403 = vunpack.c.l.b16 %v1125
    %v1404 = vunpack.c.h.b16 %v1125
    %v1405 = vunpack.c.l.b16 %v1126
    %v1406 = vunpack.c.h.b16 %v1126
    %v1407 = vunpack.c.l.b16 %v1127
    %v1408 = vunpack.c.h.b16 %v1127
    %v1409 = vunpack.c.l.b16 %v1128
    %v1410 = vunpack.c.h.b16 %v1128
    %v1411 = vunpack.c.l.b16 %v1129
    %v1412 = vunpack.c.h.b16 %v1129
    %v1413 = vunpack.c.l.b16 %v1130
    %v1414 = vunpack.c.h.b16 %v1130
    %v1415 = vunpack.c.l.b16 %v1131
    %v1416 = vunpack.c.h.b16 %v1131
    %v1417 = vunpack.c.l.b16 %v1132
    %v1418 = vunpack.c.h.b16 %v1132
    %v1419 = vunpack.c.l.b16 %v1133
    %v1420 = vunpack.c.h.b16 %v1133
    %v1421 = vunpack.c.l.b16 %v1134
    %v1422 = vunpack.c.h.b16 %v1134
    %v1423 = vunpack.c.l.b16 %v1135
    %v1424 = vunpack.c.h.b16 %v1135
    %v1425 = vunpack.c.l.b16 %v1136
    %v1426 = vunpack.c.h.b16 %v1136
    %v1427 = vunpack.c.l.b16 %v1137
    %v1428 = vunpack.c.h.b16 %v1137
    %v1429 = vunpack.c.l.b16 %v1138
    %v1430 = vunpack.c.h.b16 %v1138
    %v1431 = vunpack.c.l.b16 %v1139
    %v1432 = vunpack.c.h.b16 %v1139
    %v1433 = vunpack.c.l.b16 %v1140
    %v1434 = vunpack.c.h.b16 %v1140
    %v1435 = vunpack.c.l.b16 %v1141
    %v1436 = vunpack.c.h.b16 %v1141
    %v1437 = vunpack.c.l.b16 %v1142
    %v1438 = vunpack.c.h.b16 %v1142
    %v1439 = vunpack.c.l.b16 %v1143
    %v1440 = vunpack.c.h.b16 %v1143
    %v1441 = vunpack.c.l.b16 %v1144
    %v1442 = vunpack.c.h.b16 %v1144
    %v1443 = vunpack.c.l.b16 %v1145
    %v1444 = vunpack.c.h.b16 %v1145
    %v1445 = vunpack.c.l.b16 %v1146
    %v1446 = vunpack.c.h.b16 %v1146
    %v1447 = vunpack.c.l.b16 %v1147
    %v1448 = vunpack.c.h.b16 %v1147
    %v1449 = vunpack.c.l.b16 %v1148
    %v1450 = vunpack.c.h.b16 %v1148
    %v1451 = vunpack.c.l.b16 %v1149
    %v1452 = vunpack.c.h.b16 %v1149
    %v1453 = vunpack.c.l.b16 %v1150
    %v1454 = vunpack.c.h.b16 %v1150
    %v1455 = vunpack.c.l.b16 %v1151
    %v1456 = vunpack.c.h.b16 %v1151
    %v1457 = vunpack.c.l.b16 %v1152
    %v1458 = vunpack.c.h.b16 %v1152
    %v1459 = vunpack.c.l.b16 %v1153
    %v1460 = vunpack.c.h.b16 %v1153
    %v1461 = vunpack.c.l.b16 %v1154
    %v1462 = vunpack.c.h.b16 %v1154
    %v1463 = vunpack.c.l.b16 %v1155
    %v1464 = vunpack.c.h.b16 %v1155
    %v1465 = vunpack.c.l.b16 %v1156
    %v1466 = vunpack.c.h.b16 %v1156
    %v1467 = vunpack.c.l.b16 %v1157
    %v1468 = vunpack.c.h.b16 %v1157
    %v1469 = vunpack.c.l.b16 %v1158
    %v1470 = vunpack.c.h.b16 %v1158
    %v1471 = vunpack.c.l.b16 %v1159
    %v1472 = vunpack.c.h.b16 %v1159
    %v1473 = vunpack.c.l.b16 %v1160
    %v1474 = vunpack.c.h.b16 %v1160
    %v1475 = vunpack.c.l.b16 %v1161
    %v1476 = vunpack.c.h.b16 %v1161
    %v1477 = vunpack.c.l.b16 %v1162
    %v1478 = vunpack.c.h.b16 %v1162
    %v1479 = vunpack.c.l.b16 %v1163
    %v1480 = vunpack.c.h.b16 %v1163
    %v1481 = vunpack.c.l.b16 %v1164
    %v1482 = vunpack.c.h.b16 %v1164
    %v1483 = vunpack.c.l.b16 %v1165
    %v1484 = vunpack.c.h.b16 %v1165
    %v1485 = vunpack.c.l.b16 %v1166
    %v1486 = vunpack.c.h.b16 %v1166
    %v1487 = vunpack.c.l.b16 %v1167
    %v1488 = vunpack.c.h.b16 %v1167
    %v1489 = vunpack.c.l.b16 %v1168
    %v1490 = vunpack.c.h.b16 %v1168
    %v1491 = vunpack.c.l.b16 %v1169
    %v1492 = vunpack.c.h.b16 %v1169
    %v1493 = vunpack.c.l.b16 %v1170
    %v1494 = vunpack.c.h.b16 %v1170
    %v1495 = vunpack.c.l.b16 %v1171
    %v1496 = vunpack.c.h.b16 %v1171
    %v1497 = vunpack.c.l.b16 %v1172
    %v1498 = vunpack.c.h.b16 %v1172
    %v1499 = vunpack.c.l.b16 %v1173
    %v1500 = vunpack.c.h.b16 %v1173
    %v1501 = vunpack.c.l.b16 %v1174
    %v1502 = vunpack.c.h.b16 %v1174
    %v1503 = vunpack.c.l.b16 %v1175
    %v1504 = vunpack.c.h.b16 %v1175
    %v1505 = vunpack.c.l.b16 %v1176
    %v1506 = vunpack.c.h.b16 %v1176
    %v1507 = vunpack.c.l.b16 %v1177
    %v1508 = vunpack.c.h.b16 %v1177
    %v1509 = vunpack.c.l.b16 %v1178
    %v1510 = vunpack.c.h.b16 %v1178
    %v1511 = vunpack.c.l.b16 %v1179
    %v1512 = vunpack.c.h.b16 %v1179
    %v1513 = vunpack.c.l.b16 %v1180
    %v1514 = vunpack.c.h.b16 %v1180
    %v1515 = vunpack.c.l.b16 %v1181
    %v1516 = vunpack.c.h.b16 %v1181
    %v1517 = vunpack.c.l.b16 %v1182
    %v1518 = vunpack.c.h.b16 %v1182
    %v1519 = vunpack.c.l.b16 %v1183
    %v1520 = vunpack.c.h.b16 %v1183
    %v1521 = vunpack.c.l.b16 %v1184
    %v1522 = vunpack.c.h.b16 %v1184
    %v1523 = vunpack.c.l.b16 %v1185
    %v1524 = vunpack.c.h.b16 %v1185
    %v1525 = vunpack.c.l.b16 %v1186
    %v1526 = vunpack.c.h.b16 %v1186
    %v1527 = vunpack.c.l.b16 %v1187
    %v1528 = vunpack.c.h.b16 %v1187
    %v1529 = vunpack.c.l.b16 %v1188
    %v1530 = vunpack.c.h.b16 %v1188
    %v1531 = vunpack.c.l.b16 %v1189
    %v1532 = vunpack.c.h.b16 %v1189
    %v1533 = vunpack.c.l.b16 %v1190
    %v1534 = vunpack.c.h.b16 %v1190
    %v1535 = vunpack.c.l.b16 %v1191
    %v1536 = vunpack.c.h.b16 %v1191
    %v1537 = vunpack.c.l.b16 %v1192
    %v1538 = vunpack.c.h.b16 %v1192
    %v1539 = vunpack.c.l.b16 %v1193
    %v1540 = vunpack.c.h.b16 %v1193
    %v1541 = vunpack.c.l.b16 %v1194
    %v1542 = vunpack.c.h.b16 %v1194
    %v1543 = vunpack.c.l.b16 %v1195
    %v1544 = vunpack.c.h.b16 %v1195
    %v1545 = vunpack.c.l.b16 %v1196
    %v1546 = vunpack.c.h.b16 %v1196
    %v1547 = vunpack.c.l.b16 %v1197
    %v1548 = vunpack.c.h.b16 %v1197
    %v1549 = vunpack.c.l.b16 %v1198
    %v1550 = vunpack.c.h.b16 %v1198
    %v1551 = vunpack.c.l.b16 %v1199
    %v1552 = vunpack.c.h.b16 %v1199
    %v1553 = vunpack.c.l.b16 %v1200
    %v1554 = vunpack.c.h.b16 %v1200
    %v1555 = vunpack.c.l.b16 %v1201
    %v1556 = vunpack.c.h.b16 %v1201
    %v1557 = vunpack.c.l.b16 %v1202
    %v1558 = vunpack.c.h.b16 %v1202
    %v1559 = vunpack.c.l.b16 %v1203
    %v1560 = vunpack.c.h.b16 %v1203
    %v1561 = vunpack.c.l.b16 %v1204
    %v1562 = vunpack.c.h.b16 %v1204
    %v1563 = vunpack.c.l.b16 %v1205
    %v1564 = vunpack.c.h.b16 %v1205
    %v1565 = vunpack.c.l.b16 %v1206
    %v1566 = vunpack.c.h.b16 %v1206
    %v1567 = vunpack.c.l.b16 %v1207
    %v1568 = vunpack.c.h.b16 %v1207
    %v1569 = vunpack.c.l.b16 %v1208
    %v1570 = vunpack.c.h.b16 %v1208
    %v1571 = vunpack.c.l.b16 %v1209
    %v1572 = vunpack.c.h.b16 %v1209
    %v1573 = vunpack.c.l.b16 %v1210
    %v1574 = vunpack.c.h.b16 %v1210
    %v1575 = vunpack.c.l.b16 %v1211
    %v1576 = vunpack.c.h.b16 %v1211
    %v1577 = vunpack.c.l.b16 %v1212
    %v1578 = vunpack.c.h.b16 %v1212
    %v1579 = vunpack.c.l.b16 %v1213
    %v1580 = vunpack.c.h.b16 %v1213
    %v1581 = vunpack.c.l.b16 %v1214
    %v1582 = vunpack.c.h.b16 %v1214
    %v1583 = vunpack.c.l.b16 %v1215
    %v1584 = vunpack.c.h.b16 %v1215
    %v1585 = vunpack.c.l.b16 %v1216
    %v1586 = vunpack.c.h.b16 %v1216
    %v1587 = vunpack.c.l.b16 %v1217
    %v1588 = vunpack.c.h.b16 %v1217
    %v1589 = vunpack.c.l.b16 %v1218
    %v1590 = vunpack.c.h.b16 %v1218
    %v1591 = vunpack.c.l.b16 %v1219
    %v1592 = vunpack.c.h.b16 %v1219
    %v1593 = vunpack.c.l.b16 %v1220
    %v1594 = vunpack.c.h.b16 %v1220
    %v1595 = vunpack.c.l.b16 %v1221
    %v1596 = vunpack.c.h.b16 %v1221
    %v1597 = vunpack.c.l.b16 %v1222
    %v1598 = vunpack.c.h.b16 %v1222
    %v1599 = vunpack.c.l.b16 %v1223
    %v1600 = vunpack.c.h.b16 %v1223
    %v1601 = vunpack.c.l.b16 %v1224
    %v1602 = vunpack.c.h.b16 %v1224
    %v1603 = vunpack.c.l.b16 %v1225
    %v1604 = vunpack.c.h.b16 %v1225
    %v1605 = vunpack.c.l.b16 %v1226
    %v1606 = vunpack.c.h.b16 %v1226
    %v1607 = vunpack.c.l.b16 %v1227
    %v1608 = vunpack.c.h.b16 %v1227
    %v1609 = vunpack.c.l.b16 %v1228
    %v1610 = vunpack.c.h.b16 %v1228
    %v1611 = vunpack.c.l.b16 %v1229
    %v1612 = vunpack.c.h.b16 %v1229
    %v1613 = vunpack.c.l.b16 %v1230
    %v1614 = vunpack.c.h.b16 %v1230
    %v1615 = vunpack.c.l.b16 %v1231
    %v1616 = vunpack.c.h.b16 %v1231
    %v1617 = vunpack.c.l.b16 %v1232
    %v1618 = vunpack.c.h.b16 %v1232
    %v1619 = vunpack.c.l.b16 %v1233
    %v1620 = vunpack.c.h.b16 %v1233
    %v1621 = vunpack.c.l.b16 %v1234
    %v1622 = vunpack.c.h.b16 %v1234
    %v1623 = vunpack.c.l.b16 %v1235
    %v1624 = vunpack.c.h.b16 %v1235
    %v1625 = vunpack.c.l.b16 %v1236
    %v1626 = vunpack.c.h.b16 %v1236
    %v1627 = vunpack.c.l.b16 %v1237
    %v1628 = vunpack.c.h.b16 %v1237
    %v1629 = vunpack.c.l.b16 %v1238
    %v1630 = vunpack.c.h.b16 %v1238
    %v1631 = vunpack.c.l.b16 %v1239
    %v1632 = vunpack.c.h.b16 %v1239
    %v1633 = vunpack.c.l.b16 %v1240
    %v1634 = vunpack.c.h.b16 %v1240
    %v1635 = vunpack.c.l.b16 %v1241
    %v1636 = vunpack.c.h.b16 %v1241
    %v1637 = vunpack.c.l.b16 %v1242
    %v1638 = vunpack.c.h.b16 %v1242
    %v1639 = vpack.c.b16 %v1385, %v1383
    %v1640 = vpack.c.b16 %v1386, %v1384
    %v1641 = vpack.c.b16 %v1389, %v1387
    %v1642 = vpack.c.b16 %v1390, %v1388
    %v1643 = vpack.c.b16 %v1393, %v1391
    %v1644 = vpack.c.b16 %v1394, %v1392
    %v1645 = vpack.c.b16 %v1397, %v1395
    %v1646 = vpack.c.b16 %v1398, %v1396
    %v1647 = vpack.c.b16 %v1401, %v1399
    %v1648 = vpack.c.b16 %v1402, %v1400
    %v1649 = vpack.c.b16 %v1405, %v1403
    %v1650 = vpack.c.b16 %v1406, %v1404
    %v1651 = vpack.c.b16 %v1409, %v1407
    %v1652 = vpack.c.b16 %v1410, %v1408
    %v1653 = vpack.c.b16 %v1413, %v1411
    %v1654 = vpack.c.b16 %v1414, %v1412
    %v1655 = vpack.c.b16 %v1417, %v1415
    %v1656 = vpack.c.b16 %v1418, %v1416
    %v1657 = vpack.c.b16 %v1421, %v1419
    %v1658 = vpack.c.b16 %v1422, %v1420
    %v1659 = vpack.c.b16 %v1425, %v1423
    %v1660 = vpack.c.b16 %v1426, %v1424
    %v1661 = vpack.c.b16 %v1429, %v1427
    %v1662 = vpack.c.b16 %v1430, %v1428
    %v1663 = vpack.c.b16 %v1433, %v1431
    %v1664 = vpack.c.b16 %v1434, %v1432
    %v1665 = vpack.c.b16 %v1437, %v1435
    %v1666 = vpack.c.b16 %v1438, %v1436
    %v1667 = vpack.c.b16 %v1441, %v1439
    %v1668 = vpack.c.b16 %v1442, %v1440
    %v1669 = vpack.c.b16 %v1445, %v1443
    %v1670 = vpack.c.b16 %v1446, %v1444
    %v1671 = vpack.c.b16 %v1449, %v1447
    %v1672 = vpack.c.b16 %v1450, %v1448
    %v1673 = vpack.c.b16 %v1453, %v1451
    %v1674 = vpack.c.b16 %v1454, %v1452
    %v1675 = vpack.c.b16 %v1457, %v1455
    %v1676 = vpack.c.b16 %v1458, %v1456
    %v1677 = vpack.c.b16 %v1461, %v1459
    %v1678 = vpack.c.b16 %v1462, %v1460
    %v1679 = vpack.c.b16 %v1465, %v1463
    %v1680 = vpack.c.b16 %v1466, %v1464
    %v1681 = vpack.c.b16 %v1469, %v1467
    %v1682 = vpack.c.b16 %v1470, %v1468
    %v1683 = vpack.c.b16 %v1473, %v1471
    %v1684 = vpack.c.b16 %v1474, %v1472
    %v1685 = vpack.c.b16 %v1477, %v1475
    %v1686 = vpack.c.b16 %v1478, %v1476
    %v1687 = vpack.c.b16 %v1481, %v1479
    %v1688 = vpack.c.b16 %v1482, %v1480
    %v1689 = vpack.c.b16 %v1485, %v1483
    %v1690 = vpack.c.b16 %v1486, %v1484
    %v1691 = vpack.c.b16 %v1489, %v1487
    %v1692 = vpack.c.b16 %v1490, %v1488
    %v1693 = vpack.c.b16 %v1493, %v1491
    %v1694 = vpack.c.b16 %v1494, %v1492
    %v1695 = vpack.c.b16 %v1497, %v1495
    %v1696 = vpack.c.b16 %v1498, %v1496
    %v1697 = vpack.c.b16 %v1501, %v1499
    %v1698 = vpack.c.b16 %v1502, %v1500
    %v1699 = vpack.c.b16 %v1505, %v1503
    %v1700 = vpack.c.b16 %v1506, %v1504
    %v1701 = vpack.c.b16 %v1509, %v1507
    %v1702 = vpack.c.b16 %v1510, %v1508
    %v1703 = vpack.c.b16 %v1513, %v1511
    %v1704 = vpack.c.b16 %v1514, %v1512
    %v1705 = vpack.c.b16 %v1517, %v1515
    %v1706 = vpack.c.b16 %v1518, %v1516
    %v1707 = vpack.c.b16 %v1521, %v1519
    %v1708 = vpack.c.b16 %v1522, %v1520
    %v1709 = vpack.c.b16 %v1525, %v1523
    %v1710 = vpack.c.b16 %v1526, %v1524
    %v1711 = vpack.c.b16 %v1529, %v1527
    %v1712 = vpack.c.b16 %v1530, %v1528
    %v1713 = vpack.c.b16 %v1533, %v1531
    %v1714 = vpack.c.b16 %v1534, %v1532
    %v1715 = vpack.c.b16 %v1537, %v1535
    %v1716 = vpack.c.b16 %v1538, %v1536
    %v1717 = vpack.c.b16 %v1541, %v1539
    %v1718 = vpack.c.b16 %v1542, %v1540
    %v1719 = vpack.c.b16 %v1545, %v1543
    %v1720 = vpack.c.b16 %v1546, %v1544
    %v1721 = vpack.c.b16 %v1549, %v1547
    %v1722 = vpack.c.b16 %v1550, %v1548
    %v1723 = vpack.c.b16 %v1553, %v1551
    %v1724 = vpack.c.b16 %v1554, %v1552
    %v1725 = vpack.c.b16 %v1557, %v1555
    %v1726 = vpack.c.b16 %v1558, %v1556
    %v1727 = vpack.c.b16 %v1561, %v1559
    %v1728 = vpack.c.b16 %v1562, %v1560
    %v1729 = vpack.c.b16 %v1565, %v1563
    %v1730 = vpack.c.b16 %v1566, %v1564
    %v1731 = vpack.c.b16 %v1569, %v1567
    %v1732 = vpack.c.b16 %v1570, %v1568
    %v1733 = vpack.c.b16 %v1573, %v1571
    %v1734 = vpack.c.b16 %v1574, %v1572
    %v1735 = vpack.c.b16 %v1577, %v1575
    %v1736 = vpack.c.b16 %v1578, %v1576
    %v1737 = vpack.c.b16 %v1581, %v1579
    %v1738 = vpack.c.b16 %v1582, %v1580
    %v1739 = vpack.c.b16 %v1585, %v1583
    %v1740 = vpack.c.b16 %v1586, %v1584
    %v1741 = vpack.c.b16 %v1589, %v1587
    %v1742 = vpack.c.b16 %v1590, %v1588
    %v1743 = vpack.c.b16 %v1593, %v1591
    %v1744 = vpack.c.b16 %v1594, %v1592
    %v1745 = vpack.c.b16 %v1597, %v1595
    %v1746 = vpack.c.b16 %v1598, %v1596
    %v1747 = vpack.c.b16 %v1601, %v1599
    %v1748 = vpack.c.b16 %v1602, %v1600
    %v1749 = vpack.c.b16 %v1605, %v1603
    %v1750 = vpack.c.b16 %v1606, %v1604
    %v1751 = vpack.c.b16 %v1609, %v1607
    %v1752 = vpack.c.b16 %v1610, %v1608
    %v1753 = vpack.c.b16 %v1613, %v1611
    %v1754 = vpack.c.b16 %v1614, %v1612
    %v1755 = vpack.c.b16 %v1617, %v1615
    %v1756 = vpack.c.b16 %v1618, %v1616
    %v1757 = vpack.c.b16 %v1621, %v1619
    %v1758 = vpack.c.b16 %v1622, %v1620
    %v1759 = vpack.c.b16 %v1625, %v1623
    %v1760 = vpack.c.b16 %v1626, %v1624
    %v1761 = vpack.c.b16 %v1629, %v1627
    %v1762 = vpack.c.b16 %v1630, %v1628
    %v1763 = vpack.c.b16 %v1633, %v1631
    %v1764 = vpack.c.b16 %v1634, %v1632
    %v1765 = vpack.c.b16 %v1637, %v1635
    %v1766 = vpack.c.b16 %v1638, %v1636
    %1895 = vmatprep.subr.bf16.mxu0 %v1654
    %1896 = vmatpush1.bf16.msra.mxu0 %v1653
    %1897 = vmatprep.subr.bf16.mxu0 %v1652
    %1898 = vmatpush1.bf16.msra.mxu0 %v1651
    %1899 = vmatprep.subr.bf16.mxu0 %v1650
    %1900 = vmatpush1.bf16.msra.mxu0 %v1649
    %1901 = vmatprep.subr.bf16.mxu0 %v1648
    %1902 = vmatpush1.bf16.msra.mxu0 %v1647
    %1903 = vmatprep.subr.bf16.mxu0 %v1646
    %1904 = vmatpush1.bf16.msra.mxu0 %v1645
    %1905 = vmatprep.subr.bf16.mxu0 %v1644
    %1906 = vmatpush1.bf16.msra.mxu0 %v1643
    %1907 = vmatprep.subr.bf16.mxu0 %v1642
    %1908 = vmatpush1.bf16.msra.mxu0 %v1641
    %1909 = vmatprep.subr.bf16.mxu0 %v1640
    %1910 = vmatpush1.bf16.msra.mxu0 %v1639
    %1911 = vmatprep.subr.bf16.mxu0 %v1670
    %1912 = vmatpush2.bf16.msra.mxu0 %v1669
    %1913 = vmatprep.subr.bf16.mxu0 %v1668
    %1914 = vmatpush2.bf16.msra.mxu0 %v1667
    %1915 = vmatprep.subr.bf16.mxu0 %v1666
    %1916 = vmatpush2.bf16.msra.mxu0 %v1665
    %1917 = vmatprep.subr.bf16.mxu0 %v1664
    %1918 = vmatpush2.bf16.msra.mxu0 %v1663
    %1919 = vmatprep.subr.bf16.mxu0 %v1662
    %1920 = vmatpush2.bf16.msra.mxu0 %v1661
    %1921 = vmatprep.subr.bf16.mxu0 %v1660
    %1922 = vmatpush2.bf16.msra.mxu0 %v1659
    %1923 = vmatprep.subr.bf16.mxu0 %v1658
    %1924 = vmatpush2.bf16.msra.mxu0 %v1657
    %1925 = vmatprep.subr.bf16.mxu0 %v1656
    %1926 = vmatpush2.bf16.msra.mxu0 %v1655
    %1927 = vmatprep.mubr.bf16.mxu0 %v1100
    %1928 = vmatmul.mubr.bf16.gmra.mxu0 %v1099
    %v1929 = vpop.f32.mrf.mxu0
    %v1930 = vadd.f32 %v1248, %v1929
    %v1931 = vpop.f32.mrf.mxu0
    %v1932 = vadd.f32 %v1252, %v1931
    %v1933 = vpop.f32.mrf.mxu0
    %v1934 = vadd.f32 %v1248, %v1933
    %v1935 = vpop.f32.mrf.mxu0
    %v1936 = vadd.f32 %v1252, %v1935
    %1937 = vmatprep.mubr.bf16.mxu0 %v1108
    %1938 = vmatmul.mubr.bf16.gmra.mxu0 %v1107
    %v1939 = vpop.f32.mrf.mxu0
    %v1940 = vadd.f32 %v1248, %v1939
    %v1941 = vpop.f32.mrf.mxu0
    %v1942 = vadd.f32 %v1252, %v1941
    %v1943 = vpop.f32.mrf.mxu0
    %v1944 = vadd.f32 %v1248, %v1943
    %v1945 = vpop.f32.mrf.mxu0
    %v1946 = vadd.f32 %v1252, %v1945
    %1947 = vdwg.mxu0
    %1948 = vmatprep.subr.bf16.mxu0 %v1686
    %1949 = vmatpush1.bf16.msra.mxu0 %v1685
    %1950 = vmatprep.subr.bf16.mxu0 %v1684
    %1951 = vmatpush1.bf16.msra.mxu0 %v1683
    %1952 = vmatprep.subr.bf16.mxu0 %v1682
    %1953 = vmatpush1.bf16.msra.mxu0 %v1681
    %1954 = vmatprep.subr.bf16.mxu0 %v1680
    %1955 = vmatpush1.bf16.msra.mxu0 %v1679
    %1956 = vmatprep.subr.bf16.mxu0 %v1678
    %1957 = vmatpush1.bf16.msra.mxu0 %v1677
    %1958 = vmatprep.subr.bf16.mxu0 %v1676
    %1959 = vmatpush1.bf16.msra.mxu0 %v1675
    %1960 = vmatprep.subr.bf16.mxu0 %v1674
    %1961 = vmatpush1.bf16.msra.mxu0 %v1673
    %1962 = vmatprep.subr.bf16.mxu0 %v1672
    %1963 = vmatpush1.bf16.msra.mxu0 %v1671
    %1964 = vmatprep.subr.bf16.mxu0 %v1702
    %1965 = vmatpush2.bf16.msra.mxu0 %v1701
    %1966 = vmatprep.subr.bf16.mxu0 %v1700
    %1967 = vmatpush2.bf16.msra.mxu0 %v1699
    %1968 = vmatprep.subr.bf16.mxu0 %v1698
    %1969 = vmatpush2.bf16.msra.mxu0 %v1697
    %1970 = vmatprep.subr.bf16.mxu0 %v1696
    %1971 = vmatpush2.bf16.msra.mxu0 %v1695
    %1972 = vmatprep.subr.bf16.mxu0 %v1694
    %1973 = vmatpush2.bf16.msra.mxu0 %v1693
    %1974 = vmatprep.subr.bf16.mxu0 %v1692
    %1975 = vmatpush2.bf16.msra.mxu0 %v1691
    %1976 = vmatprep.subr.bf16.mxu0 %v1690
    %1977 = vmatpush2.bf16.msra.mxu0 %v1689
    %1978 = vmatprep.subr.bf16.mxu0 %v1688
    %1979 = vmatpush2.bf16.msra.mxu0 %v1687
    %1980 = vmatprep.mubr.bf16.mxu0 %v1102
    %1981 = vmatmul.mubr.bf16.gmra.mxu0 %v1101
    %v1982 = vpop.f32.mrf.mxu0
    %v1983 = vadd.f32 %v1930, %v1982
    %v1984 = vpop.f32.mrf.mxu0
    %v1985 = vadd.f32 %v1932, %v1984
    %v1986 = vpop.f32.mrf.mxu0
    %v1987 = vadd.f32 %v1934, %v1986
    %v1988 = vpop.f32.mrf.mxu0
    %v1989 = vadd.f32 %v1936, %v1988
    %1990 = vmatprep.mubr.bf16.mxu0 %v1110
    %1991 = vmatmul.mubr.bf16.gmra.mxu0 %v1109
    %v1992 = vpop.f32.mrf.mxu0
    %v1993 = vadd.f32 %v1940, %v1992
    %v1994 = vpop.f32.mrf.mxu0
    %v1995 = vadd.f32 %v1942, %v1994
    %v1996 = vpop.f32.mrf.mxu0
    %v1997 = vadd.f32 %v1944, %v1996
    %v1998 = vpop.f32.mrf.mxu0
    %v1999 = vadd.f32 %v1946, %v1998
    %2000 = vdwg.mxu0
    %2001 = vmatprep.subr.bf16.mxu0 %v1718
    %2002 = vmatpush1.bf16.msra.mxu0 %v1717
    %2003 = vmatprep.subr.bf16.mxu0 %v1716
    %2004 = vmatpush1.bf16.msra.mxu0 %v1715
    %2005 = vmatprep.subr.bf16.mxu0 %v1714
    %2006 = vmatpush1.bf16.msra.mxu0 %v1713
    %2007 = vmatprep.subr.bf16.mxu0 %v1712
    %2008 = vmatpush1.bf16.msra.mxu0 %v1711
    %2009 = vmatprep.subr.bf16.mxu0 %v1710
    %2010 = vmatpush1.bf16.msra.mxu0 %v1709
    %2011 = vmatprep.subr.bf16.mxu0 %v1708
    %2012 = vmatpush1.bf16.msra.mxu0 %v1707
    %2013 = vmatprep.subr.bf16.mxu0 %v1706
    %2014 = vmatpush1.bf16.msra.mxu0 %v1705
    %2015 = vmatprep.subr.bf16.mxu0 %v1704
    %2016 = vmatpush1.bf16.msra.mxu0 %v1703
    %2017 = vmatprep.subr.bf16.mxu0 %v1734
    %2018 = vmatpush2.bf16.msra.mxu0 %v1733
    %2019 = vmatprep.subr.bf16.mxu0 %v1732
    %2020 = vmatpush2.bf16.msra.mxu0 %v1731
    %2021 = vmatprep.subr.bf16.mxu0 %v1730
    %2022 = vmatpush2.bf16.msra.mxu0 %v1729
    %2023 = vmatprep.subr.bf16.mxu0 %v1728
    %2024 = vmatpush2.bf16.msra.mxu0 %v1727
    %2025 = vmatprep.subr.bf16.mxu0 %v1726
    %2026 = vmatpush2.bf16.msra.mxu0 %v1725
    %2027 = vmatprep.subr.bf16.mxu0 %v1724
    %2028 = vmatpush2.bf16.msra.mxu0 %v1723
    %2029 = vmatprep.subr.bf16.mxu0 %v1722
    %2030 = vmatpush2.bf16.msra.mxu0 %v1721
    %2031 = vmatprep.subr.bf16.mxu0 %v1720
    %2032 = vmatpush2.bf16.msra.mxu0 %v1719
    %2033 = vmatprep.mubr.bf16.mxu0 %v1104
    %2034 = vmatmul.mubr.bf16.gmra.mxu0 %v1103
    %v2035 = vpop.f32.mrf.mxu0
    %v2036 = vadd.f32 %v1983, %v2035
    %v2037 = vpop.f32.mrf.mxu0
    %v2038 = vadd.f32 %v1985, %v2037
    %v2039 = vpop.f32.mrf.mxu0
    %v2040 = vadd.f32 %v1987, %v2039
    %v2041 = vpop.f32.mrf.mxu0
    %v2042 = vadd.f32 %v1989, %v2041
    %2043 = vmatprep.mubr.bf16.mxu0 %v1112
    %2044 = vmatmul.mubr.bf16.gmra.mxu0 %v1111
    %v2045 = vpop.f32.mrf.mxu0
    %v2046 = vadd.f32 %v1993, %v2045
    %v2047 = vpop.f32.mrf.mxu0
    %v2048 = vadd.f32 %v1995, %v2047
    %v2049 = vpop.f32.mrf.mxu0
    %v2050 = vadd.f32 %v1997, %v2049
    %v2051 = vpop.f32.mrf.mxu0
    %v2052 = vadd.f32 %v1999, %v2051
    %2053 = vdwg.mxu0
    %2054 = vmatprep.subr.bf16.mxu0 %v1750
    %2055 = vmatpush1.bf16.msra.mxu0 %v1749
    %2056 = vmatprep.subr.bf16.mxu0 %v1748
    %2057 = vmatpush1.bf16.msra.mxu0 %v1747
    %2058 = vmatprep.subr.bf16.mxu0 %v1746
    %2059 = vmatpush1.bf16.msra.mxu0 %v1745
    %2060 = vmatprep.subr.bf16.mxu0 %v1744
    %2061 = vmatpush1.bf16.msra.mxu0 %v1743
    %2062 = vmatprep.subr.bf16.mxu0 %v1742
    %2063 = vmatpush1.bf16.msra.mxu0 %v1741
    %2064 = vmatprep.subr.bf16.mxu0 %v1740
    %2065 = vmatpush1.bf16.msra.mxu0 %v1739
    %2066 = vmatprep.subr.bf16.mxu0 %v1738
    %2067 = vmatpush1.bf16.msra.mxu0 %v1737
    %2068 = vmatprep.subr.bf16.mxu0 %v1736
    %2069 = vmatpush1.bf16.msra.mxu0 %v1735
    %2070 = vmatprep.subr.bf16.mxu0 %v1766
    %2071 = vmatpush2.bf16.msra.mxu0 %v1765
    %2072 = vmatprep.subr.bf16.mxu0 %v1764
    %2073 = vmatpush2.bf16.msra.mxu0 %v1763
    %2074 = vmatprep.subr.bf16.mxu0 %v1762
    %2075 = vmatpush2.bf16.msra.mxu0 %v1761
    %2076 = vmatprep.subr.bf16.mxu0 %v1760
    %2077 = vmatpush2.bf16.msra.mxu0 %v1759
    %2078 = vmatprep.subr.bf16.mxu0 %v1758
    %2079 = vmatpush2.bf16.msra.mxu0 %v1757
    %2080 = vmatprep.subr.bf16.mxu0 %v1756
    %2081 = vmatpush2.bf16.msra.mxu0 %v1755
    %2082 = vmatprep.subr.bf16.mxu0 %v1754
    %2083 = vmatpush2.bf16.msra.mxu0 %v1753
    %2084 = vmatprep.subr.bf16.mxu0 %v1752
    %2085 = vmatpush2.bf16.msra.mxu0 %v1751
    %2086 = vmatprep.mubr.bf16.mxu0 %v1106
    %2087 = vmatmul.mubr.bf16.gmra.mxu0 %v1105
    %v2088 = vpop.f32.mrf.mxu0
    %v2089 = vadd.f32 %v2036, %v2088
    %v2090 = vpop.f32.mrf.mxu0
    %v2091 = vadd.f32 %v2038, %v2090
    %v2092 = vpop.f32.mrf.mxu0
    %v2093 = vadd.f32 %v2040, %v2092
    %v2094 = vpop.f32.mrf.mxu0
    %v2095 = vadd.f32 %v2042, %v2094
    %2096 = vmatprep.mubr.bf16.mxu0 %v1114
    %2097 = vmatmul.mubr.bf16.gmra.mxu0 %v1113
    %v2098 = vpop.f32.mrf.mxu0
    %v2099 = vadd.f32 %v2046, %v2098
    %v2100 = vpop.f32.mrf.mxu0
    %v2101 = vadd.f32 %v2048, %v2100
    %v2102 = vpop.f32.mrf.mxu0
    %v2103 = vadd.f32 %v2050, %v2102
    %v2104 = vpop.f32.mrf.mxu0
    %v2105 = vadd.f32 %v2052, %v2104
    %2106 = vdwg.mxu0
    %2107 = vst [vmem:[#allocation2] sm:$0xff] %v2089
    %2108 = vst [vmem:[#allocation2 + $0x8] sm:$0xff] %v2091
    %2109 = vst [vmem:[#allocation2 + $0x10] sm:$0xff] %v2093
    %2110 = vst [vmem:[#allocation2 + $0x18] sm:$0xff] %v2095
    %2111 = vst [vmem:[#allocation2 + $0x20] sm:$0xff] %v2099
    %2112 = vst [vmem:[#allocation2 + $0x28] sm:$0xff] %v2101
    %2113 = vst [vmem:[#allocation2 + $0x30] sm:$0xff] %v2103
    %2114 = vst [vmem:[#allocation2 + $0x38] sm:$0xff] %v2105
    // Predicated region
    $region22: #{positionwise_feed_forward.1} parent=1 // pred_check
      _
    $region23: #{positionwise_feed_forward.1} parent=1 // pred_check_branch
      %2116 = sbr.rel (0) target = $region25
    $region24: #{positionwise_feed_forward.1} parent=1 // pred_region
      %s2118 = ssub.s32 1024, 1024
      %2119 = vsyncadd [#allocation3], %s2118
      %s2120 = sshll.u32 [#allocation2], 4
      %s2121 = int_to_ptr.vmem [resolvable:$true] %s2120
      %2126 = dma.vmem_to_hbm [thread:$0]  %s2121, 1024, %s5, [#allocation3], 256, 256, 16
    $region25: #{positionwise_feed_forward.1} parent=1 // pred_fallthru
      _
    // Predicated region
    $region26: #{positionwise_feed_forward.1} parent=1 // pred_check
      _
    $region27: #{positionwise_feed_forward.1} parent=1 // pred_check_branch
      %2128 = sbr.rel (0) target = $region29
    $region28: #{positionwise_feed_forward.1} parent=1 // pred_region
      %2129 = dma.done [#allocation3], 1024
    $region29: #{positionwise_feed_forward.1} parent=1 // pred_fallthru
      _
    %2130 = vsyncpa [#allocation3], 1

</llo_original>
